<compile_context>
chip_gen: v6e
topology: v6e:2x2x1
jax: 0.10.0
libtpu: 0.0.40
codegen_flags: <defaults>
</compile_context>

<pallas_src>
import functools

import jax
import jax.numpy as jnp
from jax.experimental import pallas as pl
from jax.experimental.pallas import tpu as pltpu


def _nilut_kernel(x_ref, w0_ref, b0_ref,
                  w1_ref, b1_ref,
                  w2_ref, b2_ref,
                  w3_ref, b3_ref,
                  w4_ref, b4_ref,
                  o_ref, *, act_dtype):
    """One pixel tile through the full MLP (channels-on-sublane layout).

    x_ref : (C, TN)   rgb tile (f32), also the residual input
    w*_ref: (fan_out, fan_in) torch-layout weights; biases are (fan_out, 1)
    o_ref : (C, TN)
    """
    f32 = jnp.float32
    x = x_ref[...]                                     # (C, TN) f32
    cdt = w1_ref.dtype                                 # bf16 fast path / f32

    # --- layer 0 on the VPU: K = in_ch (3) is far too shallow for the MXU;
    #     the style vector is already folded into b0_eff.
    w0 = w0_ref[...]                                   # (nf, C) f32
    h = b0_ref[...] + w0[:, 0:1] * x[0:1, :]
    for ci in range(1, w0.shape[1]):
        h = h + w0[:, ci:ci + 1] * x[ci:ci + 1, :]
    h = jnp.maximum(h, 0.0).astype(act_dtype)          # ReLU, store in act_dtype

    # --- hidden layers: bf16 operands, f32 accumulation on the MXU.
    h = jnp.tanh(jnp.dot(w1_ref[...], h.astype(cdt),
                         preferred_element_type=f32) + b1_ref[...]).astype(act_dtype)
    h = jnp.tanh(jnp.dot(w2_ref[...], h.astype(cdt),
                         preferred_element_type=f32) + b2_ref[...]).astype(act_dtype)
    h = jnp.tanh(jnp.dot(w3_ref[...], h.astype(cdt),
                         preferred_element_type=f32) + b3_ref[...]).astype(act_dtype)

    # --- output layer (+ residual + clamp); accumulate and add in f32.
    res = jnp.dot(w4_ref[...], h.astype(w4_ref.dtype),
                  preferred_element_type=f32) + b4_ref[...]
    o_ref[...] = jnp.clip(x + res, 0.0, 1.0).astype(o_ref.dtype)


def _tpu_config():
    """Per-generation tile-size / VMEM policy (review feedback)."""
    kind = ""
    vmem_cap = 64 * 1024 * 1024
    try:
        kind = jax.devices()[0].device_kind.lower()
    except Exception:
        pass
    try:
        vmem_cap = int(pltpu.get_tpu_info().vmem_capacity_bytes)
    except Exception:
        pass
    if vmem_cap >= 96 * 1024 * 1024:
        # v5e / v6e: 128 MiB VMEM -> fat 8192-lane pixel tiles.
        tile_n, vmem_limit = 8192, 64 * 1024 * 1024
    else:
        # v7x (or unknown): 64 MiB per TensorCore -> cap the working set.
        tile_n, vmem_limit = 4096, 48 * 1024 * 1024
    # bf16 activation storage only where the VPU/EUP are bf16-native (v6e/v7x);
    # v5e keeps f32 elementwise and only casts at the matmul operands.
    bf16_act = "v5" not in kind
    return tile_n, vmem_limit, bf16_act


@functools.partial(
    jax.jit, static_argnames=("tile_n", "vmem_limit", "use_bf16", "bf16_act"))
def _cnilut_impl(x_nchw, style, params, *, tile_n, vmem_limit, use_bf16, bf16_act):
    n, c, hgt, wid = x_nchw.shape
    hw = hgt * wid
    in_ch = c

    w0, b0 = params["w0"], params["b0"]
    nf = w0.shape[0]
    out_ch = params["w4"].shape[0]
    assert out_ch == in_ch, "residual `x + res` requires out_ch == in_ch"
    assert w0.shape[1] >= in_ch, "w0 must take [rgb, style] as input"

    # Fold the (constant per call) style vector into the first-layer bias.
    hp = jax.lax.Precision.HIGHEST
    b0_eff = b0 + jnp.dot(w0[:, in_ch:], style, precision=hp)          # (nf,)
    w0_rgb = w0[:, :in_ch]                                             # (nf, in_ch)

    hid_dt = jnp.bfloat16 if use_bf16 else jnp.float32
    act_dt = jnp.bfloat16 if (use_bf16 and bf16_act) else jnp.float32
    w1 = params["w1"].astype(hid_dt)
    w2 = params["w2"].astype(hid_dt)
    w3 = params["w3"].astype(hid_dt)
    w4 = params["w4"].astype(hid_dt)       # output layer also bf16, f32 accumulate

    col = lambda v: v.reshape(-1, 1).astype(jnp.float32)               # (d,) -> (d, 1)

    # Channel-major flat view: free reshape for NCHW, no transpose.
    x_flat = x_nchw.reshape(n, c, hw)

    # Pixel tile on the lane axis.  No whole-image pad: grid = cdiv(hw, tn)
    # and Pallas masks the ragged final tile's stores (op is per-lane).
    if hw >= 128:
        tn = min(tile_n, (hw // 128) * 128)
    else:
        tn = hw
    if n % 2 == 1 and hw >= 256 and -(-hw // tn) < 2:
        # Keep >= 2 pixel tiles so both v7x TensorCores get work at batch 1.
        tn = max(128, (hw // 2) // 128 * 128)
    grid = (n, -(-hw // tn))

    # The 10 weight/bias inputs are grid-constant (index_map == (0, 0)), so
    # they are DMA'd only once; their double buffers cost < 1 MiB of VMEM.
    wspec = lambda shape: pl.BlockSpec(shape, lambda bi, ji: (0, 0))

    kernel = functools.partial(_nilut_kernel, act_dtype=act_dt)

    out_flat = pl.pallas_call(
        kernel,
        out_shape=jax.ShapeDtypeStruct((n, out_ch, hw), x_nchw.dtype),
        grid_spec=pltpu.PrefetchScalarGridSpec(
            num_scalar_prefetch=0,
            grid=grid,
            in_specs=[
                pl.BlockSpec((None, c, tn), lambda bi, ji: (bi, 0, ji)),   # rgb tile
                wspec((nf, in_ch)), wspec((nf, 1)),                        # layer 0
                wspec((nf, nf)), wspec((nf, 1)),                           # layer 1
                wspec((nf, nf)), wspec((nf, 1)),                           # layer 2
                wspec((nf, nf)), wspec((nf, 1)),                           # layer 3
                wspec((out_ch, nf)), wspec((out_ch, 1)),                   # output layer
            ],
            out_specs=pl.BlockSpec((None, out_ch, tn), lambda bi, ji: (bi, 0, ji)),
        ),
        compiler_params=pltpu.CompilerParams(
            dimension_semantics=("parallel", "parallel"),
            vmem_limit_bytes=vmem_limit),
    )(x_flat,
      w0_rgb, col(b0_eff),
      w1, col(params["b1"]),
      w2, col(params["b2"]),
      w3, col(params["b3"]),
      w4, col(params["b4"]))

    return out_flat.reshape(n, out_ch, hgt, wid)


def cnilut_forward(x_nchw, style, params, *, tile_n=None, use_bf16=True):
    """Pallas implementation of CNILUT.forward.

    x_nchw : (N, C, H, W) float32 in [0, 1]
    style  : (n_style,)   float32
    params : torch-layout weights w0..w4 (fan_out, fan_in), biases b0..b4 (fan_out,)
    returns: (N, C, H, W) float32 == clamp(x + MLP([x, style]), 0, 1)
    """
    auto_tile, vmem_limit, bf16_act = _tpu_config()
    return _cnilut_impl(x_nchw, style, params,
                        tile_n=int(tile_n or auto_tile),
                        vmem_limit=int(vmem_limit),
                        use_bf16=bool(use_bf16),
                        bf16_act=bool(bf16_act))


def init_cnilut_params(key, in_ch=3, nf=256, n_layer=3, out_ch=3, n_style=3):
    """nn.Linear-style init (uniform +-1/sqrt(fan_in)), torch weight layout
    (fan_out, fan_in) and 1-D biases."""
    dims = [(in_ch + n_style, nf)] + [(nf, nf)] * n_layer + [(nf, out_ch)]
    params = {}
    for idx, (fan_in, fan_out) in enumerate(dims):
        key, kw, kb = jax.random.split(key, 3)
        bound = 1.0 / (fan_in ** 0.5)
        params[f"w{idx}"] = jax.random.uniform(
            kw, (fan_out, fan_in), jnp.float32, -bound, bound)
        params[f"b{idx}"] = jax.random.uniform(
            kb, (fan_out,), jnp.float32, -bound, bound)
    return params


def cnilut_ref(x_nchw, style, params, hidden_dtype=jnp.float32):
    """Pure-JAX reference of the torch forward.  With hidden_dtype=bfloat16 it
    mirrors the kernel's bf16 matmul policy (hidden + output layers) for a
    tight check."""
    n, c, h, w = x_nchw.shape
    hp = jax.lax.Precision.HIGHEST
    x = jnp.transpose(x_nchw, (0, 2, 3, 1)).reshape(n, h * w, c)
    sv = jnp.broadcast_to(style[None, None, :], (n, h * w, style.shape[0]))
    z = jnp.concatenate([x, sv], axis=2)

    def lin(a, i, dt=jnp.float32):
        wt, bs = params[f"w{i}"], params[f"b{i}"]
        return jnp.dot(a.astype(dt), wt.T.astype(dt), precision=hp,
                       preferred_element_type=jnp.float32) + bs

    z = jnp.maximum(lin(z, 0), 0.0)
    z = jnp.tanh(lin(z, 1, hidden_dtype))
    z = jnp.tanh(lin(z, 2, hidden_dtype))
    z = jnp.tanh(lin(z, 3, hidden_dtype))
    res = lin(z, 4, hidden_dtype)
    out = jnp.clip(x + res, 0.0, 1.0).reshape(n, h, w, c)
    return jnp.transpose(out, (0, 3, 1, 2))


if __name__ == "__main__":
    key = jax.random.PRNGKey(0)
    key, kx, kx2 = jax.random.split(key, 3)

    # Small shapes consistent with the module: RGB image batch + 3-dim style.
    N, C, H, W = 2, 3, 16, 16
    NF, N_LAYER, N_STYLE = 64, 3, 3

    x = jax.random.uniform(kx, (N, C, H, W), jnp.float32)              # pixels in [0,1]
    style = jnp.array([0.5, 0.3, 0.2], jnp.float32)                    # blending weights

    params = init_cnilut_params(key, in_ch=C, nf=NF, n_layer=N_LAYER,
                                out_ch=C, n_style=N_STYLE)

    out = jax.block_until_ready(cnilut_forward(x, style, params))
    assert out.shape == (N, C, H, W)

    # Tight check vs a reference using the same bf16 matmul policy.
    ref_matched = cnilut_ref(x, style, params, hidden_dtype=jnp.bfloat16)
    err_matched = float(jnp.max(jnp.abs(out - ref_matched)))
    assert err_matched < 5e-3, f"mismatch vs matched reference: {err_matched}"

    # Loose check vs the full-f32 reference (bf16 matmuls trade ~1e-3).
    ref_f32 = cnilut_ref(x, style, params)
    err_f32 = float(jnp.max(jnp.abs(out - ref_f32)))
    assert err_f32 < 3e-2, f"mismatch vs f32 reference: {err_f32}"

    # Ragged / odd-batch path: H*W not a multiple of the 128-lane pixel tile
    # and batch=1 (exercises the masked final tile and >=2-tile split).
    x2 = jax.random.uniform(kx2, (1, C, 12, 20), jnp.float32)          # hw = 240
    out2 = jax.block_until_ready(cnilut_forward(x2, style, params))
    ref2 = cnilut_ref(x2, style, params, hidden_dtype=jnp.bfloat16)
    err2 = float(jnp.max(jnp.abs(out2 - ref2)))
    assert err2 < 5e-3, f"mismatch on ragged-tile path: {err2}"

    print("KERNEL_OK")
</pallas_src>

<mosaic_0001>
module attributes {stable_mosaic.version = 11 : i64} {
  func.func @_nilut_kernel(%arg0: i32, %arg1: i32, %arg2: memref<1x3x256xf32, #tpu.memory_space<vmem>>, %arg3: memref<64x3xf32, #tpu.memory_space<vmem>>, %arg4: memref<64x1xf32, #tpu.memory_space<vmem>>, %arg5: memref<64x64xbf16, #tpu.memory_space<vmem>>, %arg6: memref<64x1xf32, #tpu.memory_space<vmem>>, %arg7: memref<64x64xbf16, #tpu.memory_space<vmem>>, %arg8: memref<64x1xf32, #tpu.memory_space<vmem>>, %arg9: memref<64x64xbf16, #tpu.memory_space<vmem>>, %arg10: memref<64x1xf32, #tpu.memory_space<vmem>>, %arg11: memref<3x64xbf16, #tpu.memory_space<vmem>>, %arg12: memref<3x1xf32, #tpu.memory_space<vmem>>, %arg13: memref<1x3x256xf32, #tpu.memory_space<vmem>>) attributes {dimension_semantics = [#tpu.dimension_semantics<parallel>, #tpu.dimension_semantics<parallel>], iteration_bounds = array<i64: 2, 1>, scalar_prefetch = 0 : i64, scratch_operands = 0 : i64, tpu.core_type = #tpu.core_type<tc>, window_params = [{transform_indices = @transform_0, window_bounds = array<i64: 1, 3, 256>}, {pipeline_mode = #tpu.pipeline_mode<synchronous>, transform_indices = @transform_1, window_bounds = array<i64: 64, 3>}, {pipeline_mode = #tpu.pipeline_mode<synchronous>, transform_indices = @transform_2, window_bounds = array<i64: 64, 1>}, {pipeline_mode = #tpu.pipeline_mode<synchronous>, transform_indices = @transform_3, window_bounds = array<i64: 64, 64>}, {pipeline_mode = #tpu.pipeline_mode<synchronous>, transform_indices = @transform_4, window_bounds = array<i64: 64, 1>}, {pipeline_mode = #tpu.pipeline_mode<synchronous>, transform_indices = @transform_5, window_bounds = array<i64: 64, 64>}, {pipeline_mode = #tpu.pipeline_mode<synchronous>, transform_indices = @transform_6, window_bounds = array<i64: 64, 1>}, {pipeline_mode = #tpu.pipeline_mode<synchronous>, transform_indices = @transform_7, window_bounds = array<i64: 64, 64>}, {pipeline_mode = #tpu.pipeline_mode<synchronous>, transform_indices = @transform_8, window_bounds = array<i64: 64, 1>}, {pipeline_mode = #tpu.pipeline_mode<synchronous>, transform_indices = @transform_9, window_bounds = array<i64: 3, 64>}, {pipeline_mode = #tpu.pipeline_mode<synchronous>, transform_indices = @transform_10, window_bounds = array<i64: 3, 1>}, {transform_indices = @transform_11, window_bounds = array<i64: 1, 3, 256>}]} {
    %c0 = arith.constant 0 : index
    %c0_0 = arith.constant 0 : index
    %c0_1 = arith.constant 0 : index
    %0 = vector.load %arg2[%c0, %c0_0, %c0_1] : memref<1x3x256xf32, #tpu.memory_space<vmem>>, vector<1x3x256xf32>
    %1 = vector.shape_cast %0 : vector<1x3x256xf32> to vector<3x256xf32>
    %c0_2 = arith.constant 0 : index
    %c0_3 = arith.constant 0 : index
    %2 = vector.load %arg3[%c0_2, %c0_3] : memref<64x3xf32, #tpu.memory_space<vmem>>, vector<64x3xf32>
    %c0_4 = arith.constant 0 : index
    %c0_5 = arith.constant 0 : index
    %3 = vector.load %arg4[%c0_4, %c0_5] : memref<64x1xf32, #tpu.memory_space<vmem>>, vector<64x1xf32>
    %4 = vector.extract_strided_slice %2 {offsets = [0, 0], sizes = [64, 1], strides = [1, 1]} : vector<64x3xf32> to vector<64x1xf32>
    %5 = vector.extract_strided_slice %1 {offsets = [0, 0], sizes = [1, 256], strides = [1, 1]} : vector<3x256xf32> to vector<1x256xf32>
    %6 = vector.broadcast %4 : vector<64x1xf32> to vector<64x256xf32>
    %7 = vector.broadcast %5 : vector<1x256xf32> to vector<64x256xf32>
    %8 = arith.mulf %6, %7 : vector<64x256xf32>
    %9 = vector.broadcast %3 : vector<64x1xf32> to vector<64x256xf32>
    %10 = arith.addf %9, %8 : vector<64x256xf32>
    %11 = vector.extract_strided_slice %2 {offsets = [0, 1], sizes = [64, 1], strides = [1, 1]} : vector<64x3xf32> to vector<64x1xf32>
    %12 = vector.extract_strided_slice %1 {offsets = [1, 0], sizes = [1, 256], strides = [1, 1]} : vector<3x256xf32> to vector<1x256xf32>
    %13 = vector.broadcast %11 : vector<64x1xf32> to vector<64x256xf32>
    %14 = vector.broadcast %12 : vector<1x256xf32> to vector<64x256xf32>
    %15 = arith.mulf %13, %14 : vector<64x256xf32>
    %16 = arith.addf %10, %15 : vector<64x256xf32>
    %17 = vector.extract_strided_slice %2 {offsets = [0, 2], sizes = [64, 1], strides = [1, 1]} : vector<64x3xf32> to vector<64x1xf32>
    %18 = vector.extract_strided_slice %1 {offsets = [2, 0], sizes = [1, 256], strides = [1, 1]} : vector<3x256xf32> to vector<1x256xf32>
    %19 = vector.broadcast %17 : vector<64x1xf32> to vector<64x256xf32>
    %20 = vector.broadcast %18 : vector<1x256xf32> to vector<64x256xf32>
    %21 = arith.mulf %19, %20 : vector<64x256xf32>
    %22 = arith.addf %16, %21 : vector<64x256xf32>
    %cst = arith.constant 0.000000e+00 : f32
    %23 = vector.broadcast %cst : f32 to vector<64x256xf32>
    %24 = arith.maximumf %22, %23 : vector<64x256xf32>
    %25 = arith.truncf %24 : vector<64x256xf32> to vector<64x256xbf16>
    %c0_6 = arith.constant 0 : index
    %c0_7 = arith.constant 0 : index
    %26 = vector.load %arg5[%c0_6, %c0_7] : memref<64x64xbf16, #tpu.memory_space<vmem>>, vector<64x64xbf16>
    %cst_8 = arith.constant dense<0.000000e+00> : vector<64x256xf32>
    %27 = tpu.matmul %26, %25, %cst_8 {dimension_numbers = #tpu.dot_dimension_numbers<[1], [0], [0], [1], [0, 0, 1, 1], [], []>} : vector<64x64xbf16>, vector<64x256xbf16>, vector<64x256xf32> -> vector<64x256xf32>
    %c0_9 = arith.constant 0 : index
    %c0_10 = arith.constant 0 : index
    %28 = vector.load %arg6[%c0_9, %c0_10] : memref<64x1xf32, #tpu.memory_space<vmem>>, vector<64x1xf32>
    %29 = vector.broadcast %28 : vector<64x1xf32> to vector<64x256xf32>
    %30 = arith.addf %27, %29 : vector<64x256xf32>
    %31 = math.tanh %30 : vector<64x256xf32>
    %32 = arith.truncf %31 : vector<64x256xf32> to vector<64x256xbf16>
    %c0_11 = arith.constant 0 : index
    %c0_12 = arith.constant 0 : index
    %33 = vector.load %arg7[%c0_11, %c0_12] : memref<64x64xbf16, #tpu.memory_space<vmem>>, vector<64x64xbf16>
    %cst_13 = arith.constant dense<0.000000e+00> : vector<64x256xf32>
    %34 = tpu.matmul %33, %32, %cst_13 {dimension_numbers = #tpu.dot_dimension_numbers<[1], [0], [0], [1], [0, 0, 1, 1], [], []>} : vector<64x64xbf16>, vector<64x256xbf16>, vector<64x256xf32> -> vector<64x256xf32>
    %c0_14 = arith.constant 0 : index
    %c0_15 = arith.constant 0 : index
    %35 = vector.load %arg8[%c0_14, %c0_15] : memref<64x1xf32, #tpu.memory_space<vmem>>, vector<64x1xf32>
    %36 = vector.broadcast %35 : vector<64x1xf32> to vector<64x256xf32>
    %37 = arith.addf %34, %36 : vector<64x256xf32>
    %38 = math.tanh %37 : vector<64x256xf32>
    %39 = arith.truncf %38 : vector<64x256xf32> to vector<64x256xbf16>
    %c0_16 = arith.constant 0 : index
    %c0_17 = arith.constant 0 : index
    %40 = vector.load %arg9[%c0_16, %c0_17] : memref<64x64xbf16, #tpu.memory_space<vmem>>, vector<64x64xbf16>
    %cst_18 = arith.constant dense<0.000000e+00> : vector<64x256xf32>
    %41 = tpu.matmul %40, %39, %cst_18 {dimension_numbers = #tpu.dot_dimension_numbers<[1], [0], [0], [1], [0, 0, 1, 1], [], []>} : vector<64x64xbf16>, vector<64x256xbf16>, vector<64x256xf32> -> vector<64x256xf32>
    %c0_19 = arith.constant 0 : index
    %c0_20 = arith.constant 0 : index
    %42 = vector.load %arg10[%c0_19, %c0_20] : memref<64x1xf32, #tpu.memory_space<vmem>>, vector<64x1xf32>
    %43 = vector.broadcast %42 : vector<64x1xf32> to vector<64x256xf32>
    %44 = arith.addf %41, %43 : vector<64x256xf32>
    %45 = math.tanh %44 : vector<64x256xf32>
    %46 = arith.truncf %45 : vector<64x256xf32> to vector<64x256xbf16>
    %c0_21 = arith.constant 0 : index
    %c0_22 = arith.constant 0 : index
    %47 = vector.load %arg11[%c0_21, %c0_22] : memref<3x64xbf16, #tpu.memory_space<vmem>>, vector<3x64xbf16>
    %cst_23 = arith.constant dense<0.000000e+00> : vector<3x256xf32>
    %48 = tpu.matmul %47, %46, %cst_23 {dimension_numbers = #tpu.dot_dimension_numbers<[1], [0], [0], [1], [0, 0, 1, 1], [], []>} : vector<3x64xbf16>, vector<64x256xbf16>, vector<3x256xf32> -> vector<3x256xf32>
    %c0_24 = arith.constant 0 : index
    %c0_25 = arith.constant 0 : index
    %49 = vector.load %arg12[%c0_24, %c0_25] : memref<3x1xf32, #tpu.memory_space<vmem>>, vector<3x1xf32>
    %50 = vector.broadcast %49 : vector<3x1xf32> to vector<3x256xf32>
    %51 = arith.addf %48, %50 : vector<3x256xf32>
    %52 = arith.addf %1, %51 : vector<3x256xf32>
    %cst_26 = arith.constant 0.000000e+00 : f32
    %cst_27 = arith.constant 1.000000e+00 : f32
    %53 = vector.broadcast %cst_26 : f32 to vector<3x256xf32>
    %54 = arith.maximumf %53, %52 : vector<3x256xf32>
    %55 = vector.broadcast %cst_27 : f32 to vector<3x256xf32>
    %56 = arith.minimumf %55, %54 : vector<3x256xf32>
    %c0_28 = arith.constant 0 : index
    %c0_29 = arith.constant 0 : index
    %c0_30 = arith.constant 0 : index
    %57 = vector.load %arg13[%c0_28, %c0_29, %c0_30] : memref<1x3x256xf32, #tpu.memory_space<vmem>>, vector<1x3x256xf32>
    %58 = vector.shape_cast %57 : vector<1x3x256xf32> to vector<3x256xf32>
    %59 = vector.shape_cast %56 : vector<3x256xf32> to vector<1x3x256xf32>
    tpu.vector_store %arg13[%c0_28, %c0_29, %c0_30], %59 {strides = array<i32>} : memref<1x3x256xf32, #tpu.memory_space<vmem>>, vector<1x3x256xf32>,
    return
  }
  func.func @transform_0(%arg0: i32, %arg1: i32) -> (i32, i32, i32) {
    %c0_i32 = arith.constant 0 : i32
    %c0_i32_0 = arith.constant 0 : i32
    return %arg0, %c0_i32, %arg1 : i32, i32, i32
  }
  func.func @transform_1(%arg0: i32, %arg1: i32) -> (i32, i32) {
    %c0_i32 = arith.constant 0 : i32
    %c0_i32_0 = arith.constant 0 : i32
    %c0_i32_1 = arith.constant 0 : i32
    return %c0_i32, %c0_i32_0 : i32, i32
  }
  func.func @transform_2(%arg0: i32, %arg1: i32) -> (i32, i32) {
    %c0_i32 = arith.constant 0 : i32
    %c0_i32_0 = arith.constant 0 : i32
    %c0_i32_1 = arith.constant 0 : i32
    return %c0_i32, %c0_i32_0 : i32, i32
  }
  func.func @transform_3(%arg0: i32, %arg1: i32) -> (i32, i32) {
    %c0_i32 = arith.constant 0 : i32
    %c0_i32_0 = arith.constant 0 : i32
    %c0_i32_1 = arith.constant 0 : i32
    return %c0_i32, %c0_i32_0 : i32, i32
  }
  func.func @transform_4(%arg0: i32, %arg1: i32) -> (i32, i32) {
    %c0_i32 = arith.constant 0 : i32
    %c0_i32_0 = arith.constant 0 : i32
    %c0_i32_1 = arith.constant 0 : i32
    return %c0_i32, %c0_i32_0 : i32, i32
  }
  func.func @transform_5(%arg0: i32, %arg1: i32) -> (i32, i32) {
    %c0_i32 = arith.constant 0 : i32
    %c0_i32_0 = arith.constant 0 : i32
    %c0_i32_1 = arith.constant 0 : i32
    return %c0_i32, %c0_i32_0 : i32, i32
  }
  func.func @transform_6(%arg0: i32, %arg1: i32) -> (i32, i32) {
    %c0_i32 = arith.constant 0 : i32
    %c0_i32_0 = arith.constant 0 : i32
    %c0_i32_1 = arith.constant 0 : i32
    return %c0_i32, %c0_i32_0 : i32, i32
  }
  func.func @transform_7(%arg0: i32, %arg1: i32) -> (i32, i32) {
    %c0_i32 = arith.constant 0 : i32
    %c0_i32_0 = arith.constant 0 : i32
    %c0_i32_1 = arith.constant 0 : i32
    return %c0_i32, %c0_i32_0 : i32, i32
  }
  func.func @transform_8(%arg0: i32, %arg1: i32) -> (i32, i32) {
    %c0_i32 = arith.constant 0 : i32
    %c0_i32_0 = arith.constant 0 : i32
    %c0_i32_1 = arith.constant 0 : i32
    return %c0_i32, %c0_i32_0 : i32, i32
  }
  func.func @transform_9(%arg0: i32, %arg1: i32) -> (i32, i32) {
    %c0_i32 = arith.constant 0 : i32
    %c0_i32_0 = arith.constant 0 : i32
    %c0_i32_1 = arith.constant 0 : i32
    return %c0_i32, %c0_i32_0 : i32, i32
  }
  func.func @transform_10(%arg0: i32, %arg1: i32) -> (i32, i32) {
    %c0_i32 = arith.constant 0 : i32
    %c0_i32_0 = arith.constant 0 : i32
    %c0_i32_1 = arith.constant 0 : i32
    return %c0_i32, %c0_i32_0 : i32, i32
  }
  func.func @transform_11(%arg0: i32, %arg1: i32) -> (i32, i32, i32) {
    %c0_i32 = arith.constant 0 : i32
    %c0_i32_0 = arith.constant 0 : i32
    return %arg0, %c0_i32, %arg1 : i32, i32, i32
  }
}

</mosaic_0001>

<llo_original>
// kernel: _cnilut_impl.1
$region0: #{_cnilut_impl.1}
  #allocation0 [shape = 'u32[]', space=smem, size = 0x4, offset = 0x4, fixed_abs, tag = 'smem constant byte address 0x4 - core index']
  #allocation1 [shape = 'u32[144,128]{1,0:T(1,128)}', space=vmem, size = 0x12000, scoped, tag = 'internal scratch']
  %s0 = inlined_call_operand.vmem [shape: f32[2,3,256], index: 0, kind: input, shape index: {}]
  %s1 = inlined_call_operand.vmem [shape: f32[64,3], index: 1, kind: input, shape index: {}]
  %s2 = inlined_call_operand.vmem [shape: f32[64,1], index: 2, kind: input, shape index: {}]
  %s3 = inlined_call_operand.vmem [shape: bf16[64,64], index: 3, kind: input, shape index: {}]
  %s4 = inlined_call_operand.vmem [shape: f32[64,1], index: 4, kind: input, shape index: {}]
  %s5 = inlined_call_operand.vmem [shape: bf16[64,64], index: 5, kind: input, shape index: {}]
  %s6 = inlined_call_operand.vmem [shape: f32[64,1], index: 6, kind: input, shape index: {}]
  %s7 = inlined_call_operand.vmem [shape: bf16[64,64], index: 7, kind: input, shape index: {}]
  %s8 = inlined_call_operand.vmem [shape: f32[64,1], index: 8, kind: input, shape index: {}]
  %s9 = inlined_call_operand.vmem [shape: bf16[3,64], index: 9, kind: input, shape index: {}]
  %s10 = inlined_call_operand.vmem [shape: f32[3,1], index: 10, kind: input, shape index: {}]
  %s11 = inlined_call_operand.vmem [shape: f32[2,3,256], index: 11, kind: output, shape index: {}]
  %s12 = sld [smem:[#allocation0]]
  $region77: #{_cnilut_impl.1} parent=0
    _
  %s14 = ssub.s32 1, %s12
  %s15 = scalar_select 0, %s14, %s12
  loop: start=0, step=1, limit=4
  $region2: #{_cnilut_impl.1} parent=0 // loop_pre_header
    _
  $region3: #{_cnilut_impl.1} parent=0 // loop_header
    %s17 = sphi 0, %s21
    %p18 = scmp.ge.s32.totalorder %s17, 4
    %s24 = sphi 0, %s36
    %s25 = sphi 0, %s32
    %s26 = sphi 0, %s24
    %s27 = sphi 0, %s25
    %s28 = sphi 0, %s26
    %s29 = sphi 0, %s27
    %s41 = sphi 0, %s43
    %s44 = sphi 0, %s41
    %s45 = sphi 0, %s44
    %s61 = sphi 0, %s45
    %s65 = sphi 0, %s65
    %s67 = sphi 0, %s65
    %s68 = sphi 0, %s67
    %s82 = sphi 0, %s68
    %s86 = sphi 0, %s86
    %s88 = sphi 0, %s86
    %s89 = sphi 0, %s88
    %s103 = sphi 0, %s89
    %s107 = sphi 0, %s107
    %s109 = sphi 0, %s107
    %s110 = sphi 0, %s109
    %s124 = sphi 0, %s110
    %s128 = sphi 0, %s128
    %s130 = sphi 0, %s128
    %s131 = sphi 0, %s130
    %s145 = sphi 0, %s131
    %s149 = sphi 0, %s149
    %s151 = sphi 0, %s149
    %s152 = sphi 0, %s151
    %s166 = sphi 0, %s152
    %s170 = sphi 0, %s170
    %s172 = sphi 0, %s170
    %s173 = sphi 0, %s172
    %s187 = sphi 0, %s173
    %s191 = sphi 0, %s191
    %s193 = sphi 0, %s191
    %s194 = sphi 0, %s193
    %s208 = sphi 0, %s194
    %s212 = sphi 0, %s212
    %s214 = sphi 0, %s212
    %s215 = sphi 0, %s214
    %s229 = sphi 0, %s215
    %s233 = sphi 0, %s233
    %s235 = sphi 0, %s233
    %s236 = sphi 0, %s235
    %s250 = sphi 0, %s236
    %s254 = sphi 0, %s254
    %s256 = sphi 0, %s254
    %s257 = sphi 0, %s256
    %s271 = sphi 0, %s257
    %s279 = sphi 0, %s281
    %s282 = sphi 0, %s279
    %s283 = sphi 0, %s282
    %s299 = sphi 0, %s283
  $region4: #{_cnilut_impl.1} parent=0 // loop_header_branch
    %20 = sbr.rel (%p18) target = $region8
  $region5: #{_cnilut_impl.1} parent=0 // loop_body
    %s22 = ssub.s32 %s17, 1
    %s23 = ssub.s32 %s17, 2
    %s30 = sadd.s32 1, %s25
    %p31 = scmp.ge.s32.totalorder %s30, 1
    %s32 = scalar_select %p31, 0, %s30
    %s33 = sadd.s32 1, %s24
    %s34 = scalar_select %p31, %s33, %s24
    %p35 = scmp.ge.s32.totalorder %s34, 2
    %s36 = scalar_select %p35, 0, %s34
    %s37 = ssub.s32 %s24, %s36
    %s38 = ssub.s32 %s25, %s32
    %s39 = sor.u32 %s37, %s38
    %p40 = scmp.eq.s32.totalorder %s39, 0
    %s42 = sadd.s32 %s41, 1
    %s43 = scalar_select %p40, %s41, %s42
    %p46 = pneg %p40
    %p47 = scmp.eq.s32.totalorder %s17, 1
    %p48 = por %p46, %p47
    %p49 = scmp.ne.s32.totalorder %s41, %s44
    %p50 = scmp.eq.s32.totalorder %s17, 0
    %p51 = por %p49, %p50
    %p52 = scmp.ne.s32.totalorder %s41, %s44
    %p53 = scmp.eq.s32.totalorder %s22, 1
    %p54 = por %p52, %p53
    %p55 = scmp.ne.s32.totalorder %s44, %s45
    %p56 = scmp.eq.s32.totalorder %s22, 0
    %p57 = por %p55, %p56
    %p58 = scmp.ne.s32.totalorder %s44, %s45
    %p59 = scmp.eq.s32.totalorder %s23, 1
    %p60 = por %p58, %p59
    %p62 = scmp.ne.s32.totalorder %s45, %s61
    %p63 = scmp.eq.s32.totalorder %s23, 0
    %p64 = por %p62, %p63
    %s66 = sadd.s32 %s65, 1
    %p69 = scmp.eq.s32.totalorder %s17, 1
    %p70 = scmp.ne.s32.totalorder %s65, %s67
    %p71 = scmp.eq.s32.totalorder %s17, 0
    %p72 = por %p70, %p71
    %p73 = scmp.ne.s32.totalorder %s65, %s67
    %p74 = scmp.eq.s32.totalorder %s22, 1
    %p75 = por %p73, %p74
    %p76 = scmp.ne.s32.totalorder %s67, %s68
    %p77 = scmp.eq.s32.totalorder %s22, 0
    %p78 = por %p76, %p77
    %p79 = scmp.ne.s32.totalorder %s67, %s68
    %p80 = scmp.eq.s32.totalorder %s23, 1
    %p81 = por %p79, %p80
    %p83 = scmp.ne.s32.totalorder %s68, %s82
    %p84 = scmp.eq.s32.totalorder %s23, 0
    %p85 = por %p83, %p84
    %s87 = sadd.s32 %s86, 1
    %p90 = scmp.eq.s32.totalorder %s17, 1
    %p91 = scmp.ne.s32.totalorder %s86, %s88
    %p92 = scmp.eq.s32.totalorder %s17, 0
    %p93 = por %p91, %p92
    %p94 = scmp.ne.s32.totalorder %s86, %s88
    %p95 = scmp.eq.s32.totalorder %s22, 1
    %p96 = por %p94, %p95
    %p97 = scmp.ne.s32.totalorder %s88, %s89
    %p98 = scmp.eq.s32.totalorder %s22, 0
    %p99 = por %p97, %p98
    %p100 = scmp.ne.s32.totalorder %s88, %s89
    %p101 = scmp.eq.s32.totalorder %s23, 1
    %p102 = por %p100, %p101
    %p104 = scmp.ne.s32.totalorder %s89, %s103
    %p105 = scmp.eq.s32.totalorder %s23, 0
    %p106 = por %p104, %p105
    %s108 = sadd.s32 %s107, 1
    %p111 = scmp.eq.s32.totalorder %s17, 1
    %p112 = scmp.ne.s32.totalorder %s107, %s109
    %p113 = scmp.eq.s32.totalorder %s17, 0
    %p114 = por %p112, %p113
    %p115 = scmp.ne.s32.totalorder %s107, %s109
    %p116 = scmp.eq.s32.totalorder %s22, 1
    %p117 = por %p115, %p116
    %p118 = scmp.ne.s32.totalorder %s109, %s110
    %p119 = scmp.eq.s32.totalorder %s22, 0
    %p120 = por %p118, %p119
    %p121 = scmp.ne.s32.totalorder %s109, %s110
    %p122 = scmp.eq.s32.totalorder %s23, 1
    %p123 = por %p121, %p122
    %p125 = scmp.ne.s32.totalorder %s110, %s124
    %p126 = scmp.eq.s32.totalorder %s23, 0
    %p127 = por %p125, %p126
    %s129 = sadd.s32 %s128, 1
    %p132 = scmp.eq.s32.totalorder %s17, 1
    %p133 = scmp.ne.s32.totalorder %s128, %s130
    %p134 = scmp.eq.s32.totalorder %s17, 0
    %p135 = por %p133, %p134
    %p136 = scmp.ne.s32.totalorder %s128, %s130
    %p137 = scmp.eq.s32.totalorder %s22, 1
    %p138 = por %p136, %p137
    %p139 = scmp.ne.s32.totalorder %s130, %s131
    %p140 = scmp.eq.s32.totalorder %s22, 0
    %p141 = por %p139, %p140
    %p142 = scmp.ne.s32.totalorder %s130, %s131
    %p143 = scmp.eq.s32.totalorder %s23, 1
    %p144 = por %p142, %p143
    %p146 = scmp.ne.s32.totalorder %s131, %s145
    %p147 = scmp.eq.s32.totalorder %s23, 0
    %p148 = por %p146, %p147
    %s150 = sadd.s32 %s149, 1
    %p153 = scmp.eq.s32.totalorder %s17, 1
    %p154 = scmp.ne.s32.totalorder %s149, %s151
    %p155 = scmp.eq.s32.totalorder %s17, 0
    %p156 = por %p154, %p155
    %p157 = scmp.ne.s32.totalorder %s149, %s151
    %p158 = scmp.eq.s32.totalorder %s22, 1
    %p159 = por %p157, %p158
    %p160 = scmp.ne.s32.totalorder %s151, %s152
    %p161 = scmp.eq.s32.totalorder %s22, 0
    %p162 = por %p160, %p161
    %p163 = scmp.ne.s32.totalorder %s151, %s152
    %p164 = scmp.eq.s32.totalorder %s23, 1
    %p165 = por %p163, %p164
    %p167 = scmp.ne.s32.totalorder %s152, %s166
    %p168 = scmp.eq.s32.totalorder %s23, 0
    %p169 = por %p167, %p168
    %s171 = sadd.s32 %s170, 1
    %p174 = scmp.eq.s32.totalorder %s17, 1
    %p175 = scmp.ne.s32.totalorder %s170, %s172
    %p176 = scmp.eq.s32.totalorder %s17, 0
    %p177 = por %p175, %p176
    %p178 = scmp.ne.s32.totalorder %s170, %s172
    %p179 = scmp.eq.s32.totalorder %s22, 1
    %p180 = por %p178, %p179
    %p181 = scmp.ne.s32.totalorder %s172, %s173
    %p182 = scmp.eq.s32.totalorder %s22, 0
    %p183 = por %p181, %p182
    %p184 = scmp.ne.s32.totalorder %s172, %s173
    %p185 = scmp.eq.s32.totalorder %s23, 1
    %p186 = por %p184, %p185
    %p188 = scmp.ne.s32.totalorder %s173, %s187
    %p189 = scmp.eq.s32.totalorder %s23, 0
    %p190 = por %p188, %p189
    %s192 = sadd.s32 %s191, 1
    %p195 = scmp.eq.s32.totalorder %s17, 1
    %p196 = scmp.ne.s32.totalorder %s191, %s193
    %p197 = scmp.eq.s32.totalorder %s17, 0
    %p198 = por %p196, %p197
    %p199 = scmp.ne.s32.totalorder %s191, %s193
    %p200 = scmp.eq.s32.totalorder %s22, 1
    %p201 = por %p199, %p200
    %p202 = scmp.ne.s32.totalorder %s193, %s194
    %p203 = scmp.eq.s32.totalorder %s22, 0
    %p204 = por %p202, %p203
    %p205 = scmp.ne.s32.totalorder %s193, %s194
    %p206 = scmp.eq.s32.totalorder %s23, 1
    %p207 = por %p205, %p206
    %p209 = scmp.ne.s32.totalorder %s194, %s208
    %p210 = scmp.eq.s32.totalorder %s23, 0
    %p211 = por %p209, %p210
    %s213 = sadd.s32 %s212, 1
    %p216 = scmp.eq.s32.totalorder %s17, 1
    %p217 = scmp.ne.s32.totalorder %s212, %s214
    %p218 = scmp.eq.s32.totalorder %s17, 0
    %p219 = por %p217, %p218
    %p220 = scmp.ne.s32.totalorder %s212, %s214
    %p221 = scmp.eq.s32.totalorder %s22, 1
    %p222 = por %p220, %p221
    %p223 = scmp.ne.s32.totalorder %s214, %s215
    %p224 = scmp.eq.s32.totalorder %s22, 0
    %p225 = por %p223, %p224
    %p226 = scmp.ne.s32.totalorder %s214, %s215
    %p227 = scmp.eq.s32.totalorder %s23, 1
    %p228 = por %p226, %p227
    %p230 = scmp.ne.s32.totalorder %s215, %s229
    %p231 = scmp.eq.s32.totalorder %s23, 0
    %p232 = por %p230, %p231
    %s234 = sadd.s32 %s233, 1
    %p237 = scmp.eq.s32.totalorder %s17, 1
    %p238 = scmp.ne.s32.totalorder %s233, %s235
    %p239 = scmp.eq.s32.totalorder %s17, 0
    %p240 = por %p238, %p239
    %p241 = scmp.ne.s32.totalorder %s233, %s235
    %p242 = scmp.eq.s32.totalorder %s22, 1
    %p243 = por %p241, %p242
    %p244 = scmp.ne.s32.totalorder %s235, %s236
    %p245 = scmp.eq.s32.totalorder %s22, 0
    %p246 = por %p244, %p245
    %p247 = scmp.ne.s32.totalorder %s235, %s236
    %p248 = scmp.eq.s32.totalorder %s23, 1
    %p249 = por %p247, %p248
    %p251 = scmp.ne.s32.totalorder %s236, %s250
    %p252 = scmp.eq.s32.totalorder %s23, 0
    %p253 = por %p251, %p252
    %s255 = sadd.s32 %s254, 1
    %p258 = scmp.eq.s32.totalorder %s17, 1
    %p259 = scmp.ne.s32.totalorder %s254, %s256
    %p260 = scmp.eq.s32.totalorder %s17, 0
    %p261 = por %p259, %p260
    %p262 = scmp.ne.s32.totalorder %s254, %s256
    %p263 = scmp.eq.s32.totalorder %s22, 1
    %p264 = por %p262, %p263
    %p265 = scmp.ne.s32.totalorder %s256, %s257
    %p266 = scmp.eq.s32.totalorder %s22, 0
    %p267 = por %p265, %p266
    %p268 = scmp.ne.s32.totalorder %s256, %s257
    %p269 = scmp.eq.s32.totalorder %s23, 1
    %p270 = por %p268, %p269
    %p272 = scmp.ne.s32.totalorder %s257, %s271
    %p273 = scmp.eq.s32.totalorder %s23, 0
    %p274 = por %p272, %p273
    %s275 = ssub.s32 %s24, %s36
    %s276 = ssub.s32 %s25, %s32
    %s277 = sor.u32 %s275, %s276
    %p278 = scmp.eq.s32.totalorder %s277, 0
    %s280 = sadd.s32 %s279, 1
    %s281 = scalar_select %p278, %s279, %s280
    %p284 = pneg %p278
    %p285 = scmp.eq.s32.totalorder %s17, 1
    %p286 = por %p284, %p285
    %p287 = scmp.ne.s32.totalorder %s279, %s282
    %p288 = scmp.eq.s32.totalorder %s17, 0
    %p289 = por %p287, %p288
    %p290 = scmp.ne.s32.totalorder %s279, %s282
    %p291 = scmp.eq.s32.totalorder %s22, 1
    %p292 = por %p290, %p291
    %p293 = scmp.ne.s32.totalorder %s282, %s283
    %p294 = scmp.eq.s32.totalorder %s22, 0
    %p295 = por %p293, %p294
    %p296 = scmp.ne.s32.totalorder %s282, %s283
    %p297 = scmp.eq.s32.totalorder %s23, 1
    %p298 = por %p296, %p297
    %p300 = scmp.ne.s32.totalorder %s283, %s299
    %p301 = scmp.eq.s32.totalorder %s23, 0
    %p302 = por %p300, %p301
    %p303 = scmp.le.s32.totalorder 1, %s17
    %p304 = scmp.lt.s32.totalorder %s17, 3
    %p305 = pnand %p303, %p304
    %p306 = pneg %p305
    // Predicated region
    $region9: #{_cnilut_impl.1} parent=5 // pred_check
      _
    $region10: #{_cnilut_impl.1} parent=5 // pred_check_branch
      %308 = sbr.rel (%p305) target = $region12
    $region11: #{_cnilut_impl.1} parent=5 // pred_region
      %s309 = ssub.s32 %s17, 1
      // Predicated region
      $region13: #{_cnilut_impl.1} parent=11 // pred_check
        %p310 = pneg %p78
      $region14: #{_cnilut_impl.1} parent=11 // pred_check_branch
        %312 = sbr.rel (%p310) target = $region16
      $region15: #{_cnilut_impl.1} parent=11 // pred_region
        _
      $region16: #{_cnilut_impl.1} parent=11 // pred_fallthru
        _
      // Predicated region
      $region17: #{_cnilut_impl.1} parent=11 // pred_check
        %p313 = pneg %p99
      $region18: #{_cnilut_impl.1} parent=11 // pred_check_branch
        %315 = sbr.rel (%p313) target = $region20
      $region19: #{_cnilut_impl.1} parent=11 // pred_region
        _
      $region20: #{_cnilut_impl.1} parent=11 // pred_fallthru
        _
      // Predicated region
      $region21: #{_cnilut_impl.1} parent=11 // pred_check
        %p316 = pneg %p120
      $region22: #{_cnilut_impl.1} parent=11 // pred_check_branch
        %318 = sbr.rel (%p316) target = $region24
      $region23: #{_cnilut_impl.1} parent=11 // pred_region
        _
      $region24: #{_cnilut_impl.1} parent=11 // pred_fallthru
        _
      // Predicated region
      $region25: #{_cnilut_impl.1} parent=11 // pred_check
        %p319 = pneg %p141
      $region26: #{_cnilut_impl.1} parent=11 // pred_check_branch
        %321 = sbr.rel (%p319) target = $region28
      $region27: #{_cnilut_impl.1} parent=11 // pred_region
        _
      $region28: #{_cnilut_impl.1} parent=11 // pred_fallthru
        _
      // Predicated region
      $region29: #{_cnilut_impl.1} parent=11 // pred_check
        %p322 = pneg %p162
      $region30: #{_cnilut_impl.1} parent=11 // pred_check_branch
        %324 = sbr.rel (%p322) target = $region32
      $region31: #{_cnilut_impl.1} parent=11 // pred_region
        _
      $region32: #{_cnilut_impl.1} parent=11 // pred_fallthru
        _
      // Predicated region
      $region33: #{_cnilut_impl.1} parent=11 // pred_check
        %p325 = pneg %p183
      $region34: #{_cnilut_impl.1} parent=11 // pred_check_branch
        %327 = sbr.rel (%p325) target = $region36
      $region35: #{_cnilut_impl.1} parent=11 // pred_region
        _
      $region36: #{_cnilut_impl.1} parent=11 // pred_fallthru
        _
      // Predicated region
      $region37: #{_cnilut_impl.1} parent=11 // pred_check
        %p328 = pneg %p204
      $region38: #{_cnilut_impl.1} parent=11 // pred_check_branch
        %330 = sbr.rel (%p328) target = $region40
      $region39: #{_cnilut_impl.1} parent=11 // pred_region
        _
      $region40: #{_cnilut_impl.1} parent=11 // pred_fallthru
        _
      // Predicated region
      $region41: #{_cnilut_impl.1} parent=11 // pred_check
        %p331 = pneg %p225
      $region42: #{_cnilut_impl.1} parent=11 // pred_check_branch
        %333 = sbr.rel (%p331) target = $region44
      $region43: #{_cnilut_impl.1} parent=11 // pred_region
        _
      $region44: #{_cnilut_impl.1} parent=11 // pred_fallthru
        _
      // Predicated region
      $region45: #{_cnilut_impl.1} parent=11 // pred_check
        %p334 = pneg %p246
      $region46: #{_cnilut_impl.1} parent=11 // pred_check_branch
        %336 = sbr.rel (%p334) target = $region48
      $region47: #{_cnilut_impl.1} parent=11 // pred_region
        _
      $region48: #{_cnilut_impl.1} parent=11 // pred_fallthru
        _
      // Predicated region
      $region49: #{_cnilut_impl.1} parent=11 // pred_check
        %p337 = pneg %p267
      $region50: #{_cnilut_impl.1} parent=11 // pred_check_branch
        %339 = sbr.rel (%p337) target = $region52
      $region51: #{_cnilut_impl.1} parent=11 // pred_region
        _
      $region52: #{_cnilut_impl.1} parent=11 // pred_fallthru
        _
    $region12: #{_cnilut_impl.1} parent=5 // pred_fallthru
      _
    %p340 = scmp.lt.s32.totalorder %s17, 2
    // Predicated region
    $region53: #{_cnilut_impl.1} parent=5 // pred_check
      %p341 = pneg %p340
    $region54: #{_cnilut_impl.1} parent=5 // pred_check_branch
      %343 = sbr.rel (%p341) target = $region56
    $region55: #{_cnilut_impl.1} parent=5 // pred_region
      // Predicated region
      $region57: #{_cnilut_impl.1} parent=55 // pred_check
        %p344 = pneg %p51
      $region58: #{_cnilut_impl.1} parent=55 // pred_check_branch
        %346 = sbr.rel (%p344) target = $region60
      $region59: #{_cnilut_impl.1} parent=55 // pred_region
        %s347 = smul.u32 2, %s25
        %p348 = scmp.lt.s32.totalorder %s24, 1
        %s349 = scalar_select %p348, %s24, 1
        %p350 = scmp.lt.s32.totalorder %s347, 1
        %s351 = scalar_select %p350, %s347, 1
        %s352 = smul.addr %s349, 2
        %s353 = sadd.s32 %s351, %s352
        %s354 = smul.addr %s353, 4
        %s355 = scalar_lea.vmem %s0, %s354
        %s356 = smul.u32 2, %s25
      $region60: #{_cnilut_impl.1} parent=55 // pred_fallthru
        _
    $region56: #{_cnilut_impl.1} parent=5 // pred_fallthru
      _
    %p357 = scmp.le.s32.totalorder 1, %s17
    %p358 = scmp.lt.s32.totalorder %s17, 3
    %p359 = pnand %p357, %p358
    %p360 = pneg %p359
    // Predicated region
    $region61: #{_cnilut_impl.1} parent=5 // pred_check
      _
    $region62: #{_cnilut_impl.1} parent=5 // pred_check_branch
      %362 = sbr.rel (%p359) target = $region64
    $region63: #{_cnilut_impl.1} parent=5 // pred_region
      %s363 = ssub.s32 %s17, 1
      %s364 = smul.u32 2, %s27
      %p365 = scmp.lt.s32.totalorder %s26, 1
      %s366 = scalar_select %p365, %s26, 1
      %p367 = scmp.lt.s32.totalorder %s364, 1
      %s368 = scalar_select %p367, %s364, 1
      %s369 = smul.addr %s366, 2
      %s370 = sadd.s32 %s368, %s369
      %s371 = smul.addr %s370, 4
      %s372 = scalar_lea.vmem %s0, %s371
      %p373 = pneg %p57
      %p374 = pneg %p54
      %p375 = pneg %p78
      %p376 = pneg %p75
      %p377 = pneg %p99
      %p378 = pneg %p96
      %p379 = pneg %p120
      %p380 = pneg %p117
      %p381 = pneg %p141
      %p382 = pneg %p138
      %p383 = pneg %p162
      %p384 = pneg %p159
      %p385 = pneg %p183
      %p386 = pneg %p180
      %p387 = pneg %p204
      %p388 = pneg %p201
      %p389 = pneg %p225
      %p390 = pneg %p222
      %p391 = pneg %p246
      %p392 = pneg %p243
      %p393 = pneg %p267
      %p394 = pneg %p264
      %p395 = pneg %p295
      %p396 = pneg %p292
      %s397 = smul.u32 2, %s27
      %p398 = scmp.lt.s32.totalorder %s26, 1
      %s399 = scalar_select %p398, %s26, 1
      %p400 = scmp.lt.s32.totalorder %s397, 1
      %s401 = scalar_select %p400, %s397, 1
      %s402 = smul.addr %s399, 2
      %s403 = sadd.s32 %s401, %s402
      %s404 = smul.addr %s403, 4
      %s405 = scalar_lea.vmem %s11, %s404
      %s406 = smul.u32 2, %s27
      %p407 = scmp.lt.s32.totalorder %s26, 1
      %s408 = scalar_select %p407, %s26, 1
      %p409 = scmp.lt.s32.totalorder %s406, 1
      %s410 = scalar_select %p409, %s406, 1
      %s411 = smul.addr %s408, 2
      %s412 = sadd.s32 %s410, %s411
      %s413 = smul.addr %s412, 4
      %s414 = scalar_lea.vmem %s0, %s413
      %s415 = smul.u32 2, %s27
      %s416 = smul.u32 2, %s27
      %p417 = scmp.lt.s32.totalorder %s26, 1
      %s418 = scalar_select %p417, %s26, 1
      %p419 = scmp.lt.s32.totalorder %s416, 1
      %s420 = scalar_select %p419, %s416, 1
      %s421 = smul.addr %s418, 2
      %s422 = sadd.s32 %s420, %s421
      %s423 = smul.addr %s422, 4
      %s424 = scalar_lea.vmem %s11, %s423
      %s425 = smul.u32 2, %s27
      %v427 = vld [vmem:[%s414] sm:$0x77]
      %v428 = vld [vmem:[%s1] sm:$0xff]
      %v429 = vld [vmem:[%s1 + $0x8] sm:$0xff]
      %v430 = vld [vmem:[%s1 + $0x10] sm:$0xff]
      %v431 = vld [vmem:[%s1 + $0x18] sm:$0xff]
      %v432 = vld [vmem:[%s1 + $0x20] sm:$0xff]
      %v433 = vld [vmem:[%s1 + $0x28] sm:$0xff]
      %v434 = vld [vmem:[%s1 + $0x30] sm:$0xff]
      %v435 = vld [vmem:[%s1 + $0x38] sm:$0xff]
      %v436 = vld [vmem:[%s2] sm:$0xff]
      %v437 = vld [vmem:[%s2 + $0x8] sm:$0xff]
      %v438 = vld [vmem:[%s2 + $0x10] sm:$0xff]
      %v439 = vld [vmem:[%s2 + $0x18] sm:$0xff]
      %v440 = vld [vmem:[%s2 + $0x20] sm:$0xff]
      %v441 = vld [vmem:[%s2 + $0x28] sm:$0xff]
      %v442 = vld [vmem:[%s2 + $0x30] sm:$0xff]
      %v443 = vld [vmem:[%s2 + $0x38] sm:$0xff]
      %445 = vset.pattern.permute.xlu0 0
      %446 = vperm.xlu0 %445, %v428
      %v447 = vpop.permute.xlu0 %446
      %450 = vset.pattern.permute.xlu0 0
      %451 = vperm.xlu0 %450, %v429
      %v452 = vpop.permute.xlu0 %451
      %455 = vset.pattern.permute.xlu0 0
      %456 = vperm.xlu0 %455, %v430
      %v457 = vpop.permute.xlu0 %456
      %460 = vset.pattern.permute.xlu0 0
      %461 = vperm.xlu0 %460, %v431
      %v462 = vpop.permute.xlu0 %461
      %465 = vset.pattern.permute.xlu0 0
      %466 = vperm.xlu0 %465, %v432
      %v467 = vpop.permute.xlu0 %466
      %470 = vset.pattern.permute.xlu0 0
      %471 = vperm.xlu0 %470, %v433
      %v472 = vpop.permute.xlu0 %471
      %475 = vset.pattern.permute.xlu0 0
      %476 = vperm.xlu0 %475, %v434
      %v477 = vpop.permute.xlu0 %476
      %480 = vset.pattern.permute.xlu0 0
      %481 = vperm.xlu0 %480, %v435
      %v482 = vpop.permute.xlu0 %481
      %v485 = vlaneseq
      %v486 = vshrl.u32 %v485, 7
      %v487 = vsub.s32 0, %v486
      %v488 = vrot.slane %v427, %v487
      %v489 = vlaneseq
      %v490 = vshrl.u32 %v489, 7
      %v491 = vsub.s32 4, %v490
      %v492 = vrot.slane %v427, %v491
      %v495 = vlaneseq
      %v496 = vshrl.u32 %v495, 7
      %v497 = vsub.s32 0, %v496
      %v498 = vrot.slane %v488, %v497
      %v499 = vlaneseq
      %v500 = vshrl.u32 %v499, 7
      %v501 = vsub.s32 0, %v500
      %v502 = vrot.slane %v492, %v501
      %v503 = vmul.f32 %v447, %v498
      %v504 = vmul.f32 %v447, %v502
      %v505 = vmul.f32 %v452, %v498
      %v506 = vmul.f32 %v452, %v502
      %v507 = vmul.f32 %v457, %v498
      %v508 = vmul.f32 %v457, %v502
      %v509 = vmul.f32 %v462, %v498
      %v510 = vmul.f32 %v462, %v502
      %v511 = vmul.f32 %v467, %v498
      %v512 = vmul.f32 %v467, %v502
      %v513 = vmul.f32 %v472, %v498
      %v514 = vmul.f32 %v472, %v502
      %v515 = vmul.f32 %v477, %v498
      %v516 = vmul.f32 %v477, %v502
      %v517 = vmul.f32 %v482, %v498
      %v518 = vmul.f32 %v482, %v502
      %520 = vset.pattern.permute.xlu0 0
      %521 = vperm.xlu0 %520, %v436
      %v522 = vpop.permute.xlu0 %521
      %525 = vset.pattern.permute.xlu0 0
      %526 = vperm.xlu0 %525, %v437
      %v527 = vpop.permute.xlu0 %526
      %530 = vset.pattern.permute.xlu0 0
      %531 = vperm.xlu0 %530, %v438
      %v532 = vpop.permute.xlu0 %531
      %535 = vset.pattern.permute.xlu0 0
      %536 = vperm.xlu0 %535, %v439
      %v537 = vpop.permute.xlu0 %536
      %540 = vset.pattern.permute.xlu0 0
      %541 = vperm.xlu0 %540, %v440
      %v542 = vpop.permute.xlu0 %541
      %545 = vset.pattern.permute.xlu0 0
      %546 = vperm.xlu0 %545, %v441
      %v547 = vpop.permute.xlu0 %546
      %550 = vset.pattern.permute.xlu0 0
      %551 = vperm.xlu0 %550, %v442
      %v552 = vpop.permute.xlu0 %551
      %555 = vset.pattern.permute.xlu0 0
      %556 = vperm.xlu0 %555, %v443
      %v557 = vpop.permute.xlu0 %556
      %v559 = vadd.f32 %v522, %v503
      %v560 = vadd.f32 %v522, %v504
      %v561 = vadd.f32 %v527, %v505
      %v562 = vadd.f32 %v527, %v506
      %v563 = vadd.f32 %v532, %v507
      %v564 = vadd.f32 %v532, %v508
      %v565 = vadd.f32 %v537, %v509
      %v566 = vadd.f32 %v537, %v510
      %v567 = vadd.f32 %v542, %v511
      %v568 = vadd.f32 %v542, %v512
      %v569 = vadd.f32 %v547, %v513
      %v570 = vadd.f32 %v547, %v514
      %v571 = vadd.f32 %v552, %v515
      %v572 = vadd.f32 %v552, %v516
      %v573 = vadd.f32 %v557, %v517
      %v574 = vadd.f32 %v557, %v518
      %575 = vset.pattern.permute.xlu0 1
      %576 = vperm.xlu0 %575, %v428
      %v577 = vpop.permute.xlu0 %576
      %579 = vset.pattern.permute.xlu0 1
      %580 = vperm.xlu0 %579, %v429
      %v581 = vpop.permute.xlu0 %580
      %583 = vset.pattern.permute.xlu0 1
      %584 = vperm.xlu0 %583, %v430
      %v585 = vpop.permute.xlu0 %584
      %587 = vset.pattern.permute.xlu0 1
      %588 = vperm.xlu0 %587, %v431
      %v589 = vpop.permute.xlu0 %588
      %591 = vset.pattern.permute.xlu0 1
      %592 = vperm.xlu0 %591, %v432
      %v593 = vpop.permute.xlu0 %592
      %595 = vset.pattern.permute.xlu0 1
      %596 = vperm.xlu0 %595, %v433
      %v597 = vpop.permute.xlu0 %596
      %599 = vset.pattern.permute.xlu0 1
      %600 = vperm.xlu0 %599, %v434
      %v601 = vpop.permute.xlu0 %600
      %603 = vset.pattern.permute.xlu0 1
      %604 = vperm.xlu0 %603, %v435
      %v605 = vpop.permute.xlu0 %604
      %v607 = vlaneseq
      %v608 = vshrl.u32 %v607, 7
      %v609 = vsub.s32 1, %v608
      %v610 = vrot.slane %v427, %v609
      %v611 = vlaneseq
      %v612 = vshrl.u32 %v611, 7
      %v613 = vsub.s32 5, %v612
      %v614 = vrot.slane %v427, %v613
      %v617 = vlaneseq
      %v618 = vshrl.u32 %v617, 7
      %v619 = vsub.s32 1, %v618
      %v620 = vrot.slane %v610, %v619
      %v621 = vlaneseq
      %v622 = vshrl.u32 %v621, 7
      %v623 = vsub.s32 1, %v622
      %v624 = vrot.slane %v614, %v623
      %v625 = vmul.f32 %v577, %v620
      %v626 = vmul.f32 %v577, %v624
      %v627 = vmul.f32 %v581, %v620
      %v628 = vmul.f32 %v581, %v624
      %v629 = vmul.f32 %v585, %v620
      %v630 = vmul.f32 %v585, %v624
      %v631 = vmul.f32 %v589, %v620
      %v632 = vmul.f32 %v589, %v624
      %v633 = vmul.f32 %v593, %v620
      %v634 = vmul.f32 %v593, %v624
      %v635 = vmul.f32 %v597, %v620
      %v636 = vmul.f32 %v597, %v624
      %v637 = vmul.f32 %v601, %v620
      %v638 = vmul.f32 %v601, %v624
      %v639 = vmul.f32 %v605, %v620
      %v640 = vmul.f32 %v605, %v624
      %v641 = vadd.f32 %v559, %v625
      %v642 = vadd.f32 %v560, %v626
      %v643 = vadd.f32 %v561, %v627
      %v644 = vadd.f32 %v562, %v628
      %v645 = vadd.f32 %v563, %v629
      %v646 = vadd.f32 %v564, %v630
      %v647 = vadd.f32 %v565, %v631
      %v648 = vadd.f32 %v566, %v632
      %v649 = vadd.f32 %v567, %v633
      %v650 = vadd.f32 %v568, %v634
      %v651 = vadd.f32 %v569, %v635
      %v652 = vadd.f32 %v570, %v636
      %v653 = vadd.f32 %v571, %v637
      %v654 = vadd.f32 %v572, %v638
      %v655 = vadd.f32 %v573, %v639
      %v656 = vadd.f32 %v574, %v640
      %657 = vset.pattern.permute.xlu0 2
      %658 = vperm.xlu0 %657, %v428
      %v659 = vpop.permute.xlu0 %658
      %661 = vset.pattern.permute.xlu0 2
      %662 = vperm.xlu0 %661, %v429
      %v663 = vpop.permute.xlu0 %662
      %665 = vset.pattern.permute.xlu0 2
      %666 = vperm.xlu0 %665, %v430
      %v667 = vpop.permute.xlu0 %666
      %669 = vset.pattern.permute.xlu0 2
      %670 = vperm.xlu0 %669, %v431
      %v671 = vpop.permute.xlu0 %670
      %673 = vset.pattern.permute.xlu0 2
      %674 = vperm.xlu0 %673, %v432
      %v675 = vpop.permute.xlu0 %674
      %677 = vset.pattern.permute.xlu0 2
      %678 = vperm.xlu0 %677, %v433
      %v679 = vpop.permute.xlu0 %678
      %681 = vset.pattern.permute.xlu0 2
      %682 = vperm.xlu0 %681, %v434
      %v683 = vpop.permute.xlu0 %682
      %685 = vset.pattern.permute.xlu0 2
      %686 = vperm.xlu0 %685, %v435
      %v687 = vpop.permute.xlu0 %686
      %v689 = vlaneseq
      %v690 = vshrl.u32 %v689, 7
      %v691 = vsub.s32 2, %v690
      %v692 = vrot.slane %v427, %v691
      %v693 = vlaneseq
      %v694 = vshrl.u32 %v693, 7
      %v695 = vsub.s32 6, %v694
      %v696 = vrot.slane %v427, %v695
      %v699 = vlaneseq
      %v700 = vshrl.u32 %v699, 7
      %v701 = vsub.s32 2, %v700
      %v702 = vrot.slane %v692, %v701
      %v703 = vlaneseq
      %v704 = vshrl.u32 %v703, 7
      %v705 = vsub.s32 2, %v704
      %v706 = vrot.slane %v696, %v705
      %v707 = vmul.f32 %v659, %v702
      %v708 = vmul.f32 %v659, %v706
      %v709 = vmul.f32 %v663, %v702
      %v710 = vmul.f32 %v663, %v706
      %v711 = vmul.f32 %v667, %v702
      %v712 = vmul.f32 %v667, %v706
      %v713 = vmul.f32 %v671, %v702
      %v714 = vmul.f32 %v671, %v706
      %v715 = vmul.f32 %v675, %v702
      %v716 = vmul.f32 %v675, %v706
      %v717 = vmul.f32 %v679, %v702
      %v718 = vmul.f32 %v679, %v706
      %v719 = vmul.f32 %v683, %v702
      %v720 = vmul.f32 %v683, %v706
      %v721 = vmul.f32 %v687, %v702
      %v722 = vmul.f32 %v687, %v706
      %v723 = vadd.f32 %v641, %v707
      %v724 = vadd.f32 %v642, %v708
      %v725 = vadd.f32 %v643, %v709
      %v726 = vadd.f32 %v644, %v710
      %v727 = vadd.f32 %v645, %v711
      %v728 = vadd.f32 %v646, %v712
      %v729 = vadd.f32 %v647, %v713
      %v730 = vadd.f32 %v648, %v714
      %v731 = vadd.f32 %v649, %v715
      %v732 = vadd.f32 %v650, %v716
      %v733 = vadd.f32 %v651, %v717
      %v734 = vadd.f32 %v652, %v718
      %v735 = vadd.f32 %v653, %v719
      %v736 = vadd.f32 %v654, %v720
      %v737 = vadd.f32 %v655, %v721
      %v738 = vadd.f32 %v656, %v722
      %v739 = vmax.f32 %v723, 0.0
      %v740 = vmax.f32 %v724, 0.0
      %v741 = vmax.f32 %v725, 0.0
      %v742 = vmax.f32 %v726, 0.0
      %v743 = vmax.f32 %v727, 0.0
      %v744 = vmax.f32 %v728, 0.0
      %v745 = vmax.f32 %v729, 0.0
      %v746 = vmax.f32 %v730, 0.0
      %v747 = vmax.f32 %v731, 0.0
      %v748 = vmax.f32 %v732, 0.0
      %v749 = vmax.f32 %v733, 0.0
      %v750 = vmax.f32 %v734, 0.0
      %v751 = vmax.f32 %v735, 0.0
      %v752 = vmax.f32 %v736, 0.0
      %v753 = vmax.f32 %v737, 0.0
      %v754 = vmax.f32 %v738, 0.0
      %v755 = vpack.c.bf16 %v741, %v739
      %v756 = vpack.c.bf16 %v742, %v740
      %v757 = vpack.c.bf16 %v745, %v743
      %v758 = vpack.c.bf16 %v746, %v744
      %v759 = vpack.c.bf16 %v749, %v747
      %v760 = vpack.c.bf16 %v750, %v748
      %v761 = vpack.c.bf16 %v753, %v751
      %v762 = vpack.c.bf16 %v754, %v752
      %v763 = vld [vmem:[%s3] sm:$0xf]
      %v764 = vld [vmem:[%s3 + $0x4] sm:$0xf]
      %v765 = vld [vmem:[%s3 + $0x8] sm:$0xf]
      %v766 = vld [vmem:[%s3 + $0xc] sm:$0xf]
      %v767 = vld [vmem:[%s3 + $0x10] sm:$0xf]
      %v768 = vld [vmem:[%s3 + $0x14] sm:$0xf]
      %v769 = vld [vmem:[%s3 + $0x18] sm:$0xf]
      %v770 = vld [vmem:[%s3 + $0x1c] sm:$0xf]
      %v771 = vld [vmem:[%s4] sm:$0xff]
      %v772 = vld [vmem:[%s4 + $0x8] sm:$0xff]
      %v773 = vld [vmem:[%s4 + $0x10] sm:$0xff]
      %v774 = vld [vmem:[%s4 + $0x18] sm:$0xff]
      %v775 = vld [vmem:[%s4 + $0x20] sm:$0xff]
      %v776 = vld [vmem:[%s4 + $0x28] sm:$0xff]
      %v777 = vld [vmem:[%s4 + $0x30] sm:$0xff]
      %v778 = vld [vmem:[%s4 + $0x38] sm:$0xff]
      %780 = vset.pattern.permute.xlu0 0
      %781 = vperm.xlu0 %780, %v771
      %v782 = vpop.permute.xlu0 %781
      %785 = vset.pattern.permute.xlu0 0
      %786 = vperm.xlu0 %785, %v772
      %v787 = vpop.permute.xlu0 %786
      %790 = vset.pattern.permute.xlu0 0
      %791 = vperm.xlu0 %790, %v773
      %v792 = vpop.permute.xlu0 %791
      %795 = vset.pattern.permute.xlu0 0
      %796 = vperm.xlu0 %795, %v774
      %v797 = vpop.permute.xlu0 %796
      %800 = vset.pattern.permute.xlu0 0
      %801 = vperm.xlu0 %800, %v775
      %v802 = vpop.permute.xlu0 %801
      %805 = vset.pattern.permute.xlu0 0
      %806 = vperm.xlu0 %805, %v776
      %v807 = vpop.permute.xlu0 %806
      %810 = vset.pattern.permute.xlu0 0
      %811 = vperm.xlu0 %810, %v777
      %v812 = vpop.permute.xlu0 %811
      %815 = vset.pattern.permute.xlu0 0
      %816 = vperm.xlu0 %815, %v778
      %v817 = vpop.permute.xlu0 %816
      %v827 = vunpack.c.l.b16 %v763
      %v828 = vunpack.c.l.b16 %v764
      %v829 = vunpack.c.l.b16 %v765
      %v830 = vunpack.c.l.b16 %v766
      %v831 = vunpack.c.l.b16 %v767
      %v832 = vunpack.c.l.b16 %v768
      %v833 = vunpack.c.l.b16 %v769
      %v834 = vunpack.c.l.b16 %v770
      %v835 = vpack.c.b16 %v828, %v827
      %v836 = vpack.c.b16 %v830, %v829
      %v837 = vpack.c.b16 %v832, %v831
      %v838 = vpack.c.b16 %v834, %v833
      %vm839 = vcmask 523264
      %v841 = vsel %vm839, %v835, 0
      %v844 = vsel %vm839, %v836, 0
      %v847 = vsel %vm839, %v837, 0
      %v850 = vsel %vm839, %v838, 0
      %852 = vmatprep.subr.bf16.mxu0 0
      %853 = vmatpush1.bf16.msra.mxu0 0
      %854 = vmatprep.subr.bf16.mxu0 0
      %855 = vmatpush1.bf16.msra.mxu0 0
      %856 = vmatprep.subr.bf16.mxu0 0
      %857 = vmatpush1.bf16.msra.mxu0 0
      %858 = vmatprep.subr.bf16.mxu0 0
      %859 = vmatpush1.bf16.msra.mxu0 0
      %860 = vmatprep.subr.bf16.mxu0 %v762
      %861 = vmatpush1.bf16.msra.mxu0 %v761
      %862 = vmatprep.subr.bf16.mxu0 %v760
      %863 = vmatpush1.bf16.msra.mxu0 %v759
      %864 = vmatprep.subr.bf16.mxu0 %v758
      %865 = vmatpush1.bf16.msra.mxu0 %v757
      %866 = vmatprep.subr.bf16.mxu0 %v756
      %867 = vmatpush1.bf16.msra.mxu0 %v755
      %868 = vmatprep.subr.bf16.mxu0 0
      %869 = vmatpush2.bf16.msra.mxu0 0
      %870 = vmatprep.subr.bf16.mxu0 0
      %871 = vmatpush2.bf16.msra.mxu0 0
      %872 = vmatprep.subr.bf16.mxu0 0
      %873 = vmatpush2.bf16.msra.mxu0 0
      %874 = vmatprep.subr.bf16.mxu0 0
      %875 = vmatpush2.bf16.msra.mxu0 0
      %876 = vmatprep.subr.bf16.mxu0 0
      %877 = vmatpush2.bf16.msra.mxu0 0
      %878 = vmatprep.subr.bf16.mxu0 0
      %879 = vmatpush2.bf16.msra.mxu0 0
      %880 = vmatprep.subr.bf16.mxu0 0
      %881 = vmatpush2.bf16.msra.mxu0 0
      %882 = vmatprep.subr.bf16.mxu0 0
      %883 = vmatpush2.bf16.msra.mxu0 0
      %884 = vmatprep.mubr.bf16.mxu0 0
      %885 = vmatmul.mubr.bf16.gmra.mxu0 %v841
      %v886 = vpop.f32.mrf.mxu0
      %v887 = vadd.f32 %v782, %v886
      %v888 = vpop.f32.mrf.mxu0
      %v889 = vadd.f32 %v782, %v888
      %v890 = vpop.f32.mrf.mxu0
      %v891 = vadd.f32 %v787, %v890
      %v892 = vpop.f32.mrf.mxu0
      %v893 = vadd.f32 %v787, %v892
      %894 = vmatprep.mubr.bf16.mxu0 0
      %895 = vmatmul.mubr.bf16.gmra.mxu0 %v844
      %v896 = vpop.f32.mrf.mxu0
      %v897 = vadd.f32 %v792, %v896
      %v898 = vpop.f32.mrf.mxu0
      %v899 = vadd.f32 %v792, %v898
      %v900 = vpop.f32.mrf.mxu0
      %v901 = vadd.f32 %v797, %v900
      %v902 = vpop.f32.mrf.mxu0
      %v903 = vadd.f32 %v797, %v902
      %904 = vmatprep.mubr.bf16.mxu0 0
      %905 = vmatmul.mubr.bf16.gmra.mxu0 %v847
      %v906 = vpop.f32.mrf.mxu0
      %v907 = vadd.f32 %v802, %v906
      %v908 = vpop.f32.mrf.mxu0
      %v909 = vadd.f32 %v802, %v908
      %v910 = vpop.f32.mrf.mxu0
      %v911 = vadd.f32 %v807, %v910
      %v912 = vpop.f32.mrf.mxu0
      %v913 = vadd.f32 %v807, %v912
      %914 = vmatprep.mubr.bf16.mxu0 0
      %915 = vmatmul.mubr.bf16.gmra.mxu0 %v850
      %v916 = vpop.f32.mrf.mxu0
      %v917 = vadd.f32 %v812, %v916
      %v918 = vpop.f32.mrf.mxu0
      %v919 = vadd.f32 %v812, %v918
      %v920 = vpop.f32.mrf.mxu0
      %v921 = vadd.f32 %v817, %v920
      %v922 = vpop.f32.mrf.mxu0
      %v923 = vadd.f32 %v817, %v922
      %924 = vdwg.mxu0
      %v925 = vtanh.pop %v887
      %v926 = vtanh.pop %v889
      %v927 = vtanh.pop %v891
      %v928 = vtanh.pop %v893
      %v929 = vtanh.pop %v897
      %v930 = vtanh.pop %v899
      %v931 = vtanh.pop %v901
      %v932 = vtanh.pop %v903
      %v933 = vtanh.pop %v907
      %v934 = vtanh.pop %v909
      %v935 = vtanh.pop %v911
      %v936 = vtanh.pop %v913
      %v937 = vtanh.pop %v917
      %v938 = vtanh.pop %v919
      %v939 = vtanh.pop %v921
      %v940 = vtanh.pop %v923
      %v941 = vpack.c.bf16 %v927, %v925
      %v942 = vpack.c.bf16 %v928, %v926
      %v943 = vpack.c.bf16 %v931, %v929
      %v944 = vpack.c.bf16 %v932, %v930
      %v945 = vpack.c.bf16 %v935, %v933
      %v946 = vpack.c.bf16 %v936, %v934
      %v947 = vpack.c.bf16 %v939, %v937
      %v948 = vpack.c.bf16 %v940, %v938
      %v949 = vld [vmem:[%s5] sm:$0xf]
      %v950 = vld [vmem:[%s5 + $0x4] sm:$0xf]
      %v951 = vld [vmem:[%s5 + $0x8] sm:$0xf]
      %v952 = vld [vmem:[%s5 + $0xc] sm:$0xf]
      %v953 = vld [vmem:[%s5 + $0x10] sm:$0xf]
      %v954 = vld [vmem:[%s5 + $0x14] sm:$0xf]
      %v955 = vld [vmem:[%s5 + $0x18] sm:$0xf]
      %v956 = vld [vmem:[%s5 + $0x1c] sm:$0xf]
      %v957 = vld [vmem:[%s6] sm:$0xff]
      %v958 = vld [vmem:[%s6 + $0x8] sm:$0xff]
      %v959 = vld [vmem:[%s6 + $0x10] sm:$0xff]
      %v960 = vld [vmem:[%s6 + $0x18] sm:$0xff]
      %v961 = vld [vmem:[%s6 + $0x20] sm:$0xff]
      %v962 = vld [vmem:[%s6 + $0x28] sm:$0xff]
      %v963 = vld [vmem:[%s6 + $0x30] sm:$0xff]
      %v964 = vld [vmem:[%s6 + $0x38] sm:$0xff]
      %966 = vset.pattern.permute.xlu0 0
      %967 = vperm.xlu0 %966, %v957
      %v968 = vpop.permute.xlu0 %967
      %971 = vset.pattern.permute.xlu0 0
      %972 = vperm.xlu0 %971, %v958
      %v973 = vpop.permute.xlu0 %972
      %976 = vset.pattern.permute.xlu0 0
      %977 = vperm.xlu0 %976, %v959
      %v978 = vpop.permute.xlu0 %977
      %981 = vset.pattern.permute.xlu0 0
      %982 = vperm.xlu0 %981, %v960
      %v983 = vpop.permute.xlu0 %982
      %986 = vset.pattern.permute.xlu0 0
      %987 = vperm.xlu0 %986, %v961
      %v988 = vpop.permute.xlu0 %987
      %991 = vset.pattern.permute.xlu0 0
      %992 = vperm.xlu0 %991, %v962
      %v993 = vpop.permute.xlu0 %992
      %996 = vset.pattern.permute.xlu0 0
      %997 = vperm.xlu0 %996, %v963
      %v998 = vpop.permute.xlu0 %997
      %1001 = vset.pattern.permute.xlu0 0
      %1002 = vperm.xlu0 %1001, %v964
      %v1003 = vpop.permute.xlu0 %1002
      %v1013 = vunpack.c.l.b16 %v949
      %v1014 = vunpack.c.l.b16 %v950
      %v1015 = vunpack.c.l.b16 %v951
      %v1016 = vunpack.c.l.b16 %v952
      %v1017 = vunpack.c.l.b16 %v953
      %v1018 = vunpack.c.l.b16 %v954
      %v1019 = vunpack.c.l.b16 %v955
      %v1020 = vunpack.c.l.b16 %v956
      %v1021 = vpack.c.b16 %v1014, %v1013
      %v1022 = vpack.c.b16 %v1016, %v1015
      %v1023 = vpack.c.b16 %v1018, %v1017
      %v1024 = vpack.c.b16 %v1020, %v1019
      %v1026 = vsel %vm839, %v1021, 0
      %v1029 = vsel %vm839, %v1022, 0
      %v1032 = vsel %vm839, %v1023, 0
      %v1035 = vsel %vm839, %v1024, 0
      %1037 = vmatprep.subr.bf16.mxu0 0
      %1038 = vmatpush1.bf16.msra.mxu0 0
      %1039 = vmatprep.subr.bf16.mxu0 0
      %1040 = vmatpush1.bf16.msra.mxu0 0
      %1041 = vmatprep.subr.bf16.mxu0 0
      %1042 = vmatpush1.bf16.msra.mxu0 0
      %1043 = vmatprep.subr.bf16.mxu0 0
      %1044 = vmatpush1.bf16.msra.mxu0 0
      %1045 = vmatprep.subr.bf16.mxu0 %v948
      %1046 = vmatpush1.bf16.msra.mxu0 %v947
      %1047 = vmatprep.subr.bf16.mxu0 %v946
      %1048 = vmatpush1.bf16.msra.mxu0 %v945
      %1049 = vmatprep.subr.bf16.mxu0 %v944
      %1050 = vmatpush1.bf16.msra.mxu0 %v943
      %1051 = vmatprep.subr.bf16.mxu0 %v942
      %1052 = vmatpush1.bf16.msra.mxu0 %v941
      %1053 = vmatprep.subr.bf16.mxu0 0
      %1054 = vmatpush2.bf16.msra.mxu0 0
      %1055 = vmatprep.subr.bf16.mxu0 0
      %1056 = vmatpush2.bf16.msra.mxu0 0
      %1057 = vmatprep.subr.bf16.mxu0 0
      %1058 = vmatpush2.bf16.msra.mxu0 0
      %1059 = vmatprep.subr.bf16.mxu0 0
      %1060 = vmatpush2.bf16.msra.mxu0 0
      %1061 = vmatprep.subr.bf16.mxu0 0
      %1062 = vmatpush2.bf16.msra.mxu0 0
      %1063 = vmatprep.subr.bf16.mxu0 0
      %1064 = vmatpush2.bf16.msra.mxu0 0
      %1065 = vmatprep.subr.bf16.mxu0 0
      %1066 = vmatpush2.bf16.msra.mxu0 0
      %1067 = vmatprep.subr.bf16.mxu0 0
      %1068 = vmatpush2.bf16.msra.mxu0 0
      %1069 = vmatprep.mubr.bf16.mxu0 0
      %1070 = vmatmul.mubr.bf16.gmra.mxu0 %v1026
      %v1071 = vpop.f32.mrf.mxu0
      %v1072 = vadd.f32 %v968, %v1071
      %v1073 = vpop.f32.mrf.mxu0
      %v1074 = vadd.f32 %v968, %v1073
      %v1075 = vpop.f32.mrf.mxu0
      %v1076 = vadd.f32 %v973, %v1075
      %v1077 = vpop.f32.mrf.mxu0
      %v1078 = vadd.f32 %v973, %v1077
      %1079 = vmatprep.mubr.bf16.mxu0 0
      %1080 = vmatmul.mubr.bf16.gmra.mxu0 %v1029
      %v1081 = vpop.f32.mrf.mxu0
      %v1082 = vadd.f32 %v978, %v1081
      %v1083 = vpop.f32.mrf.mxu0
      %v1084 = vadd.f32 %v978, %v1083
      %v1085 = vpop.f32.mrf.mxu0
      %v1086 = vadd.f32 %v983, %v1085
      %v1087 = vpop.f32.mrf.mxu0
      %v1088 = vadd.f32 %v983, %v1087
      %1089 = vmatprep.mubr.bf16.mxu0 0
      %1090 = vmatmul.mubr.bf16.gmra.mxu0 %v1032
      %v1091 = vpop.f32.mrf.mxu0
      %v1092 = vadd.f32 %v988, %v1091
      %v1093 = vpop.f32.mrf.mxu0
      %v1094 = vadd.f32 %v988, %v1093
      %v1095 = vpop.f32.mrf.mxu0
      %v1096 = vadd.f32 %v993, %v1095
      %v1097 = vpop.f32.mrf.mxu0
      %v1098 = vadd.f32 %v993, %v1097
      %1099 = vmatprep.mubr.bf16.mxu0 0
      %1100 = vmatmul.mubr.bf16.gmra.mxu0 %v1035
      %v1101 = vpop.f32.mrf.mxu0
      %v1102 = vadd.f32 %v998, %v1101
      %v1103 = vpop.f32.mrf.mxu0
      %v1104 = vadd.f32 %v998, %v1103
      %v1105 = vpop.f32.mrf.mxu0
      %v1106 = vadd.f32 %v1003, %v1105
      %v1107 = vpop.f32.mrf.mxu0
      %v1108 = vadd.f32 %v1003, %v1107
      %1109 = vdwg.mxu0
      %v1110 = vtanh.pop %v1072
      %v1111 = vtanh.pop %v1074
      %v1112 = vtanh.pop %v1076
      %v1113 = vtanh.pop %v1078
      %v1114 = vtanh.pop %v1082
      %v1115 = vtanh.pop %v1084
      %v1116 = vtanh.pop %v1086
      %v1117 = vtanh.pop %v1088
      %v1118 = vtanh.pop %v1092
      %v1119 = vtanh.pop %v1094
      %v1120 = vtanh.pop %v1096
      %v1121 = vtanh.pop %v1098
      %v1122 = vtanh.pop %v1102
      %v1123 = vtanh.pop %v1104
      %v1124 = vtanh.pop %v1106
      %v1125 = vtanh.pop %v1108
      %v1126 = vpack.c.bf16 %v1112, %v1110
      %v1127 = vpack.c.bf16 %v1113, %v1111
      %v1128 = vpack.c.bf16 %v1116, %v1114
      %v1129 = vpack.c.bf16 %v1117, %v1115
      %v1130 = vpack.c.bf16 %v1120, %v1118
      %v1131 = vpack.c.bf16 %v1121, %v1119
      %v1132 = vpack.c.bf16 %v1124, %v1122
      %v1133 = vpack.c.bf16 %v1125, %v1123
      %v1134 = vld [vmem:[%s7] sm:$0xf]
      %v1135 = vld [vmem:[%s7 + $0x4] sm:$0xf]
      %v1136 = vld [vmem:[%s7 + $0x8] sm:$0xf]
      %v1137 = vld [vmem:[%s7 + $0xc] sm:$0xf]
      %v1138 = vld [vmem:[%s7 + $0x10] sm:$0xf]
      %v1139 = vld [vmem:[%s7 + $0x14] sm:$0xf]
      %v1140 = vld [vmem:[%s7 + $0x18] sm:$0xf]
      %v1141 = vld [vmem:[%s7 + $0x1c] sm:$0xf]
      %v1142 = vld [vmem:[%s8] sm:$0xff]
      %v1143 = vld [vmem:[%s8 + $0x8] sm:$0xff]
      %v1144 = vld [vmem:[%s8 + $0x10] sm:$0xff]
      %v1145 = vld [vmem:[%s8 + $0x18] sm:$0xff]
      %v1146 = vld [vmem:[%s8 + $0x20] sm:$0xff]
      %v1147 = vld [vmem:[%s8 + $0x28] sm:$0xff]
      %v1148 = vld [vmem:[%s8 + $0x30] sm:$0xff]
      %v1149 = vld [vmem:[%s8 + $0x38] sm:$0xff]
      %1151 = vset.pattern.permute.xlu0 0
      %1152 = vperm.xlu0 %1151, %v1142
      %v1153 = vpop.permute.xlu0 %1152
      %1156 = vset.pattern.permute.xlu0 0
      %1157 = vperm.xlu0 %1156, %v1143
      %v1158 = vpop.permute.xlu0 %1157
      %1161 = vset.pattern.permute.xlu0 0
      %1162 = vperm.xlu0 %1161, %v1144
      %v1163 = vpop.permute.xlu0 %1162
      %1166 = vset.pattern.permute.xlu0 0
      %1167 = vperm.xlu0 %1166, %v1145
      %v1168 = vpop.permute.xlu0 %1167
      %1171 = vset.pattern.permute.xlu0 0
      %1172 = vperm.xlu0 %1171, %v1146
      %v1173 = vpop.permute.xlu0 %1172
      %1176 = vset.pattern.permute.xlu0 0
      %1177 = vperm.xlu0 %1176, %v1147
      %v1178 = vpop.permute.xlu0 %1177
      %1181 = vset.pattern.permute.xlu0 0
      %1182 = vperm.xlu0 %1181, %v1148
      %v1183 = vpop.permute.xlu0 %1182
      %1186 = vset.pattern.permute.xlu0 0
      %1187 = vperm.xlu0 %1186, %v1149
      %v1188 = vpop.permute.xlu0 %1187
      %v1198 = vunpack.c.l.b16 %v1134
      %v1199 = vunpack.c.l.b16 %v1135
      %v1200 = vunpack.c.l.b16 %v1136
      %v1201 = vunpack.c.l.b16 %v1137
      %v1202 = vunpack.c.l.b16 %v1138
      %v1203 = vunpack.c.l.b16 %v1139
      %v1204 = vunpack.c.l.b16 %v1140
      %v1205 = vunpack.c.l.b16 %v1141
      %v1206 = vpack.c.b16 %v1199, %v1198
      %v1207 = vpack.c.b16 %v1201, %v1200
      %v1208 = vpack.c.b16 %v1203, %v1202
      %v1209 = vpack.c.b16 %v1205, %v1204
      %v1211 = vsel %vm839, %v1206, 0
      %v1214 = vsel %vm839, %v1207, 0
      %v1217 = vsel %vm839, %v1208, 0
      %v1220 = vsel %vm839, %v1209, 0
      %1222 = vmatprep.subr.bf16.mxu0 0
      %1223 = vmatpush1.bf16.msra.mxu0 0
      %1224 = vmatprep.subr.bf16.mxu0 0
      %1225 = vmatpush1.bf16.msra.mxu0 0
      %1226 = vmatprep.subr.bf16.mxu0 0
      %1227 = vmatpush1.bf16.msra.mxu0 0
      %1228 = vmatprep.subr.bf16.mxu0 0
      %1229 = vmatpush1.bf16.msra.mxu0 0
      %1230 = vmatprep.subr.bf16.mxu0 %v1133
      %1231 = vmatpush1.bf16.msra.mxu0 %v1132
      %1232 = vmatprep.subr.bf16.mxu0 %v1131
      %1233 = vmatpush1.bf16.msra.mxu0 %v1130
      %1234 = vmatprep.subr.bf16.mxu0 %v1129
      %1235 = vmatpush1.bf16.msra.mxu0 %v1128
      %1236 = vmatprep.subr.bf16.mxu0 %v1127
      %1237 = vmatpush1.bf16.msra.mxu0 %v1126
      %1238 = vmatprep.subr.bf16.mxu0 0
      %1239 = vmatpush2.bf16.msra.mxu0 0
      %1240 = vmatprep.subr.bf16.mxu0 0
      %1241 = vmatpush2.bf16.msra.mxu0 0
      %1242 = vmatprep.subr.bf16.mxu0 0
      %1243 = vmatpush2.bf16.msra.mxu0 0
      %1244 = vmatprep.subr.bf16.mxu0 0
      %1245 = vmatpush2.bf16.msra.mxu0 0
      %1246 = vmatprep.subr.bf16.mxu0 0
      %1247 = vmatpush2.bf16.msra.mxu0 0
      %1248 = vmatprep.subr.bf16.mxu0 0
      %1249 = vmatpush2.bf16.msra.mxu0 0
      %1250 = vmatprep.subr.bf16.mxu0 0
      %1251 = vmatpush2.bf16.msra.mxu0 0
      %1252 = vmatprep.subr.bf16.mxu0 0
      %1253 = vmatpush2.bf16.msra.mxu0 0
      %1254 = vmatprep.mubr.bf16.mxu0 0
      %1255 = vmatmul.mubr.bf16.gmra.mxu0 %v1211
      %v1256 = vpop.f32.mrf.mxu0
      %v1257 = vadd.f32 %v1153, %v1256
      %v1258 = vpop.f32.mrf.mxu0
      %v1259 = vadd.f32 %v1153, %v1258
      %v1260 = vpop.f32.mrf.mxu0
      %v1261 = vadd.f32 %v1158, %v1260
      %v1262 = vpop.f32.mrf.mxu0
      %v1263 = vadd.f32 %v1158, %v1262
      %1264 = vmatprep.mubr.bf16.mxu0 0
      %1265 = vmatmul.mubr.bf16.gmra.mxu0 %v1214
      %v1266 = vpop.f32.mrf.mxu0
      %v1267 = vadd.f32 %v1163, %v1266
      %v1268 = vpop.f32.mrf.mxu0
      %v1269 = vadd.f32 %v1163, %v1268
      %v1270 = vpop.f32.mrf.mxu0
      %v1271 = vadd.f32 %v1168, %v1270
      %v1272 = vpop.f32.mrf.mxu0
      %v1273 = vadd.f32 %v1168, %v1272
      %1274 = vmatprep.mubr.bf16.mxu0 0
      %1275 = vmatmul.mubr.bf16.gmra.mxu0 %v1217
      %v1276 = vpop.f32.mrf.mxu0
      %v1277 = vadd.f32 %v1173, %v1276
      %v1278 = vpop.f32.mrf.mxu0
      %v1279 = vadd.f32 %v1173, %v1278
      %v1280 = vpop.f32.mrf.mxu0
      %v1281 = vadd.f32 %v1178, %v1280
      %v1282 = vpop.f32.mrf.mxu0
      %v1283 = vadd.f32 %v1178, %v1282
      %1284 = vmatprep.mubr.bf16.mxu0 0
      %1285 = vmatmul.mubr.bf16.gmra.mxu0 %v1220
      %v1286 = vpop.f32.mrf.mxu0
      %v1287 = vadd.f32 %v1183, %v1286
      %v1288 = vpop.f32.mrf.mxu0
      %v1289 = vadd.f32 %v1183, %v1288
      %v1290 = vpop.f32.mrf.mxu0
      %v1291 = vadd.f32 %v1188, %v1290
      %v1292 = vpop.f32.mrf.mxu0
      %v1293 = vadd.f32 %v1188, %v1292
      %1294 = vdwg.mxu0
      %v1295 = vtanh.pop %v1257
      %v1296 = vtanh.pop %v1259
      %v1297 = vtanh.pop %v1261
      %v1298 = vtanh.pop %v1263
      %v1299 = vtanh.pop %v1267
      %v1300 = vtanh.pop %v1269
      %v1301 = vtanh.pop %v1271
      %v1302 = vtanh.pop %v1273
      %v1303 = vtanh.pop %v1277
      %v1304 = vtanh.pop %v1279
      %v1305 = vtanh.pop %v1281
      %v1306 = vtanh.pop %v1283
      %v1307 = vtanh.pop %v1287
      %v1308 = vtanh.pop %v1289
      %v1309 = vtanh.pop %v1291
      %v1310 = vtanh.pop %v1293
      %v1311 = vpack.c.bf16 %v1297, %v1295
      %v1312 = vpack.c.bf16 %v1298, %v1296
      %v1313 = vpack.c.bf16 %v1301, %v1299
      %v1314 = vpack.c.bf16 %v1302, %v1300
      %v1315 = vpack.c.bf16 %v1305, %v1303
      %v1316 = vpack.c.bf16 %v1306, %v1304
      %v1317 = vpack.c.bf16 %v1309, %v1307
      %v1318 = vpack.c.bf16 %v1310, %v1308
      %v1319 = vld [vmem:[%s9] sm:$0x3]
      %v1320 = vld [vmem:[%s10] sm:$0x7]
      %1322 = vset.pattern.permute.xlu0 0
      %1323 = vperm.xlu0 %1322, %v1320
      %v1324 = vpop.permute.xlu0 %1323
      %v1327 = vsel %vm839, %v1319, 0
      %1329 = vmatprep.subr.bf16.mxu0 0
      %1330 = vmatpush1.bf16.msra.mxu0 0
      %1331 = vmatprep.subr.bf16.mxu0 0
      %1332 = vmatpush1.bf16.msra.mxu0 0
      %1333 = vmatprep.subr.bf16.mxu0 0
      %1334 = vmatpush1.bf16.msra.mxu0 0
      %1335 = vmatprep.subr.bf16.mxu0 0
      %1336 = vmatpush1.bf16.msra.mxu0 0
      %1337 = vmatprep.subr.bf16.mxu0 %v1318
      %1338 = vmatpush1.bf16.msra.mxu0 %v1317
      %1339 = vmatprep.subr.bf16.mxu0 %v1316
      %1340 = vmatpush1.bf16.msra.mxu0 %v1315
      %1341 = vmatprep.subr.bf16.mxu0 %v1314
      %1342 = vmatpush1.bf16.msra.mxu0 %v1313
      %1343 = vmatprep.subr.bf16.mxu0 %v1312
      %1344 = vmatpush1.bf16.msra.mxu0 %v1311
      %1345 = vmatprep.subr.bf16.mxu0 0
      %1346 = vmatpush2.bf16.msra.mxu0 0
      %1347 = vmatprep.subr.bf16.mxu0 0
      %1348 = vmatpush2.bf16.msra.mxu0 0
      %1349 = vmatprep.subr.bf16.mxu0 0
      %1350 = vmatpush2.bf16.msra.mxu0 0
      %1351 = vmatprep.subr.bf16.mxu0 0
      %1352 = vmatpush2.bf16.msra.mxu0 0
      %1353 = vmatprep.subr.bf16.mxu0 0
      %1354 = vmatpush2.bf16.msra.mxu0 0
      %1355 = vmatprep.subr.bf16.mxu0 0
      %1356 = vmatpush2.bf16.msra.mxu0 0
      %1357 = vmatprep.subr.bf16.mxu0 0
      %1358 = vmatpush2.bf16.msra.mxu0 0
      %1359 = vmatprep.subr.bf16.mxu0 0
      %1360 = vmatpush2.bf16.msra.mxu0 0
      %1361 = vmatprep.mubr.bf16.mxu0 0
      %1362 = vmatmul.mubr.bf16.gmra.mxu0 %v1327
      %v1363 = vpop.f32.mrf.mxu0
      %v1364 = vadd.f32 %v1324, %v1363
      %v1365 = vpop.f32.mrf.mxu0
      %v1366 = vadd.f32 %v1324, %v1365
      %v1367 = vpop.f32.mrf.mxu0
      %v1368 = vpop.f32.mrf.mxu0
      %1369 = vdwg.mxu0
      %v1372 = vcombine.low %v1364, %v1366
      %v1374 = vadd.f32 %v427, %v1372
      %v1375 = vmax.f32 %v1374, 0.0
      %v1376 = vmin.f32 %v1375, 1.0
      %1377 = vst [vmem:[%s424] sm:$0x77] %v1376
      %s1378 = smul.u32 2, %s27
      %p1379 = scmp.lt.s32.totalorder %s26, 1
      %s1380 = scalar_select %p1379, %s26, 1
      %p1381 = scmp.lt.s32.totalorder %s1378, 1
      %s1382 = scalar_select %p1381, %s1378, 1
      %s1383 = smul.addr %s1380, 2
      %s1384 = sadd.s32 %s1382, %s1383
      %s1385 = smul.addr %s1384, 4
      %s1386 = scalar_lea.vmem %s11, %s1385
      // Predicated region
      $region65: #{_cnilut_impl.1} parent=63 // pred_check
        %p1387 = pneg %p292
      $region66: #{_cnilut_impl.1} parent=63 // pred_check_branch
        %1389 = sbr.rel (%p1387) target = $region68
      $region67: #{_cnilut_impl.1} parent=63 // pred_region
        %s1390 = smul.u32 2, %s27
      $region68: #{_cnilut_impl.1} parent=63 // pred_fallthru
        _
    $region64: #{_cnilut_impl.1} parent=5 // pred_fallthru
      _
    %p1391 = scmp.le.s32.totalorder 2, %s17
    // Predicated region
    $region69: #{_cnilut_impl.1} parent=5 // pred_check
      %p1392 = pneg %p1391
    $region70: #{_cnilut_impl.1} parent=5 // pred_check_branch
      %1394 = sbr.rel (%p1392) target = $region72
    $region71: #{_cnilut_impl.1} parent=5 // pred_region
      %s1395 = ssub.s32 %s17, 2
      // Predicated region
      $region73: #{_cnilut_impl.1} parent=71 // pred_check
        %p1396 = pneg %p298
      $region74: #{_cnilut_impl.1} parent=71 // pred_check_branch
        %1398 = sbr.rel (%p1396) target = $region76
      $region75: #{_cnilut_impl.1} parent=71 // pred_region
        %s1399 = smul.u32 2, %s29
        %p1400 = scmp.lt.s32.totalorder %s28, 1
        %s1401 = scalar_select %p1400, %s28, 1
        %p1402 = scmp.lt.s32.totalorder %s1399, 1
        %s1403 = scalar_select %p1402, %s1399, 1
        %s1404 = smul.addr %s1401, 2
        %s1405 = sadd.s32 %s1403, %s1404
        %s1406 = smul.addr %s1405, 4
        %s1407 = scalar_lea.vmem %s11, %s1406
      $region76: #{_cnilut_impl.1} parent=71 // pred_fallthru
        _
    $region72: #{_cnilut_impl.1} parent=5 // pred_fallthru
      _
  $region6: #{_cnilut_impl.1} parent=0 // loop_footer
    %s21 = sadd.s32 1, %s17
  $region7: #{_cnilut_impl.1} parent=0 // loop_footer_branch
    %16 = sbr.rel target = $region3
  $region8: #{_cnilut_impl.1} parent=0 // loop_exit
    _

</llo_original>
